<compile_context>
chip_gen: v5e
topology: v5e:2x2
jax: 0.10.0
libtpu: 0.0.40
codegen_flags: <defaults>
</compile_context>

<pallas_src>
import numpy as np
import jax
import jax.numpy as jnp
from jax.experimental import pallas as pl
from jax.experimental.pallas import tpu as pltpu


_VMEM = pl.BlockSpec(memory_space=pltpu.MemorySpace.VMEM)
_CLASS_PAD = 128          # lane-dense width of the final log-prob slab
_SAGE_PAD = 128           # lane-dense width of the SAGE-stack output slab
_NEG_PAD = -1e30          # bias for padded (dummy) classes -> exp() == 0
_GRAPH_BLOCK = 8          # graphs per grid step in the conv head


# ---------------------------------------------------------------------------
# Kernel 1: fused SAGE stack (all layers in one call)
# ---------------------------------------------------------------------------
def _make_sage_stack_kernel(num_layers):
    def kernel(*refs):
        a_ref, x_ref = refs[0], refs[1]
        layer_refs = refs[2:2 + 3 * num_layers]
        o_ref = refs[2 + 3 * num_layers]

        a = a_ref[...]                       # [N, N] bf16, loaded once
        h = x_ref[...]                       # [N, F] f32
        for i in range(num_layers):
            wl = layer_refs[3 * i][...]      # [d_in, d_out] bf16 (lin_l^T)
            wr = layer_refs[3 * i + 1][...]  # [d_in, d_out] bf16 (lin_r^T)
            b = layer_refs[3 * i + 2][...]   # [1, d_out]  f32
            h_bf = h.astype(jnp.bfloat16)    # single bf16 cast per layer
            # mean aggregation == normalized dense adjacency matmul
            agg = jnp.dot(a, h_bf, preferred_element_type=jnp.float32)
            # SAGEConv: lin_l(agg) + lin_r(x); two dots, f32 accumulate,
            # no lane-axis concat relayout.
            h = jnp.maximum(
                jnp.dot(agg.astype(jnp.bfloat16), wl,
                        preferred_element_type=jnp.float32)
                + jnp.dot(h_bf, wr, preferred_element_type=jnp.float32)
                + b, 0.0)
        o_ref[...] = h                       # [N, 128] lane-dense store
    return kernel


def sage_stack(a_norm_bf16, x, layers):
    """layers: list of (wl [d_in,d_out] bf16, wr [d_in,d_out] bf16, b [1,d_out] f32)."""
    n = x.shape[0]
    out_w = layers[-1][0].shape[1]           # 128 (padded last layer)
    num_layers = len(layers)

    flops = 0
    bytes_accessed = a_norm_bf16.size * 2 + x.size * 4 + n * out_w * 4
    d = x.shape[1]
    for (wl, wr, b) in layers:
        flops += 2 * n * n * d + 4 * n * d * wl.shape[1]
        bytes_accessed += wl.size * 2 + wr.size * 2 + b.size * 4
        d = wl.shape[1]

    args = [a_norm_bf16, x]
    for layer in layers:
        args += list(layer)

    # TODO(synk): at large N, tiling the fused multi-layer stack needs either
    # one pallas_call per layer (row x k grid, f32 VMEM accumulator, pl.when
    # init/finalize, 'parallel' row axis, pl.Buffered a-tiles) or HBM-resident
    # intermediates, since every layer mixes all rows; whole-array VMEM
    # residency (with the raised vmem limit below) is right at demo size.
    return pl.pallas_call(
        _make_sage_stack_kernel(num_layers),
        out_shape=jax.ShapeDtypeStruct((n, out_w), jnp.float32),
        in_specs=[_VMEM] * len(args),
        out_specs=_VMEM,
        compiler_params=pltpu.CompilerParams(
            vmem_limit_bytes=48 * 1024 * 1024),
        cost_estimate=pl.CostEstimate(flops=int(flops), transcendentals=0,
                                      bytes_accessed=int(bytes_accessed)),
    )(*args)


# ---------------------------------------------------------------------------
# Kernel 2: fused Conv1d (block-Toeplitz matmul) + lin1 + relu + lin2
#           + log_softmax, gridded over graphs
# ---------------------------------------------------------------------------
def _conv_head_kernel(p_ref, cw_ref, cb_ref, w1_ref, b1_ref, w2_ref, b2_ref,
                      o_ref):
    pooled = p_ref[...].astype(jnp.bfloat16)                    # [bB, k*hid]
    # Conv1d as a single block-Toeplitz matmul; output already in the
    # channel-last flattened order lin1's (permuted) rows expect.
    conv = jnp.maximum(
        jnp.dot(pooled, cw_ref[...], preferred_element_type=jnp.float32)
        + cb_ref[...], 0.0)                                     # [bB, L*32]
    # lin1 + relu + (dropout == identity in eval) + lin2
    h = jnp.maximum(
        jnp.dot(conv.astype(jnp.bfloat16), w1_ref[...],
                preferred_element_type=jnp.float32) + b1_ref[...], 0.0)
    logits = (jnp.dot(h.astype(jnp.bfloat16), w2_ref[...],
                      preferred_element_type=jnp.float32)
              + b2_ref[...])                                    # [bB, 128]
    # log_softmax over the lane-dense (padded) class axis
    m = jnp.max(logits, axis=-1, keepdims=True)
    lse = m + jnp.log(jnp.sum(jnp.exp(logits - m), axis=-1, keepdims=True))
    o_ref[...] = logits - lse


def conv_head(pooled, conv_w, conv_b, lin1_w, lin1_b, lin2_w, lin2_b):
    B, khid = pooled.shape
    n_pad = lin2_w.shape[1]

    bB = _GRAPH_BLOCK
    B_pad = ((B + bB - 1) // bB) * bB
    if B_pad != B:
        pooled = jnp.pad(pooled, ((0, B_pad - B), (0, 0)))
    grid = (B_pad // bB,)

    lc = conv_w.shape[1]
    hid1 = lin1_w.shape[1]
    flops = 2 * B_pad * (khid * lc + lc * hid1 + hid1 * n_pad)
    bytes_accessed = (pooled.size * 4
                      + conv_w.size * 2 + conv_b.size * 4
                      + lin1_w.size * 2 + lin1_b.size * 4
                      + lin2_w.size * 2 + lin2_b.size * 4
                      + B_pad * n_pad * 4)

    def full(arr):
        return pl.BlockSpec(arr.shape, lambda i: (0, 0))

    gs = pltpu.PrefetchScalarGridSpec(
        num_scalar_prefetch=0, grid=grid,
        in_specs=[pl.BlockSpec((bB, khid), lambda i: (i, 0)),
                  full(conv_w), full(conv_b),
                  full(lin1_w), full(lin1_b),
                  full(lin2_w), full(lin2_b)],
        out_specs=pl.BlockSpec((bB, n_pad), lambda i: (i, 0)))

    out = pl.pallas_call(
        _conv_head_kernel,
        out_shape=jax.ShapeDtypeStruct((B_pad, n_pad), jnp.float32),
        grid_spec=gs,
        compiler_params=pltpu.CompilerParams(
            dimension_semantics=("parallel",),
            vmem_limit_bytes=32 * 1024 * 1024),
        cost_estimate=pl.CostEstimate(flops=int(flops),
                                      transcendentals=int(B_pad * (n_pad + 1)),
                                      bytes_accessed=int(bytes_accessed)),
    )(pooled, conv_w, conv_b, lin1_w, lin1_b, lin2_w, lin2_b)
    return out[:B]                                              # [B, 128]


# ---------------------------------------------------------------------------
# SortAggregation (plain-JAX glue: data-dependent sort / scatter)
# ---------------------------------------------------------------------------
# TODO(synk): per-graph sort + dense-batch scatter is a data-dependent gather
# with no clean Pallas equivalent; kept in plain JAX.
def sort_aggregation(x, batch, num_graphs, max_nodes, k):
    fill = jnp.min(x) - 1.0
    n_total, d = x.shape
    counts = jnp.zeros((num_graphs,), jnp.int32).at[batch].add(1)
    starts = jnp.concatenate(
        [jnp.zeros((1,), jnp.int32), jnp.cumsum(counts)[:-1].astype(jnp.int32)])
    pos = jnp.arange(n_total, dtype=jnp.int32) - starts[batch]
    dense = jnp.full((num_graphs, max_nodes, d), fill, dtype=x.dtype)
    dense = dense.at[batch, pos].set(x)
    # sort nodes of each graph by the last feature channel, descending
    perm = jnp.argsort(-dense[:, :, -1], axis=-1)
    dense = jnp.take_along_axis(dense, perm[:, :, None], axis=1)
    if max_nodes >= k:
        dense = dense[:, :k]
    else:
        pad = jnp.full((num_graphs, k - max_nodes, d), fill, dtype=x.dtype)
        dense = jnp.concatenate([dense, pad], axis=1)
    dense = jnp.where(dense == fill, 0.0, dense)
    return dense.reshape(num_graphs, k * d)


# ---------------------------------------------------------------------------
# Full forward pass
# ---------------------------------------------------------------------------
def sortpool_forward(x, a_norm, batch, params, *, num_graphs, max_nodes, k,
                     num_classes, hidden):
    h_pad = sage_stack(a_norm.astype(jnp.bfloat16), x, params["sage"])  # [N,128]
    h = h_pad[:, :hidden]                                               # [N,hid]

    pooled = sort_aggregation(h, batch, num_graphs, max_nodes, k)       # [B,k*hid]

    logp = conv_head(pooled, params["conv1d_w"], params["conv1d_b"],
                     params["lin1_w"], params["lin1_b"],
                     params["lin2_w"], params["lin2_b"])                # [B,128]
    return logp[:, :num_classes]


# ---------------------------------------------------------------------------
# Deterministic parameter construction (kernel-ready layout)
# ---------------------------------------------------------------------------
def _glorot(key, shape):
    fan_in, fan_out = shape[0], shape[-1]
    lim = float(np.sqrt(6.0 / (fan_in + fan_out)))
    return jax.random.uniform(key, shape, jnp.float32, -lim, lim)


def make_params(num_features, hidden, num_layers, k, num_classes):
    kernel_size = num_layers
    L = k - kernel_size + 1
    keys = jax.random.split(jax.random.PRNGKey(42), 2 * num_layers + 8)
    ki = iter(range(len(keys)))

    # --- SAGE layers: separate lin_l / lin_r (no stacked-concat matmul).
    #     Final layer padded to 128 output lanes -> lane-dense kernel store.
    sage = []
    in_dim = num_features
    for li in range(num_layers):
        wl = _glorot(keys[next(ki)], (in_dim, hidden))    # lin_l weight^T
        wr = _glorot(keys[next(ki)], (in_dim, hidden))    # lin_r weight^T
        b = jnp.zeros((hidden,), jnp.float32)
        if li == num_layers - 1:
            wl = jnp.pad(wl, ((0, 0), (0, _SAGE_PAD - hidden)))
            wr = jnp.pad(wr, ((0, 0), (0, _SAGE_PAD - hidden)))
            b = jnp.pad(b, (0, _SAGE_PAD - hidden))
        sage.append((wl.astype(jnp.bfloat16), wr.astype(jnp.bfloat16),
                     b.reshape(1, -1)))
        in_dim = hidden

    # --- Conv1d weight [32, hidden, ks] folded into a block-Toeplitz matmul
    #     weight:  W_toep[(l+s)*hid + c, l*32 + o] = conv_w[o, c, s]
    #     so pooled[B, k*hid] @ W_toep == Conv1d output, already flattened in
    #     channel-last order (column index l*32 + o).
    conv_w = np.asarray(_glorot(keys[next(ki)], (32, hidden, kernel_size)))
    w_toep = np.zeros((k * hidden, L * 32), np.float32)
    for l in range(L):
        for s in range(kernel_size):
            w_toep[(l + s) * hidden:(l + s + 1) * hidden,
                   l * 32:(l + 1) * 32] = conv_w[:, :, s].T
    conv1d_w = jnp.asarray(w_toep).astype(jnp.bfloat16)
    conv_b = 0.01 * jnp.arange(32, dtype=jnp.float32)
    conv1d_b = jnp.tile(conv_b, (L,)).reshape(1, L * 32)

    # --- lin1: PyTorch row order is o*L + l (from [B,32,L].view(B,-1)); fold
    #     that channel-major flatten into a static row permutation so the
    #     kernel's channel-last conv column (l*32 + o) hits the matching row.
    lin1_w = _glorot(keys[next(ki)], (32 * L, hidden))
    perm = np.array([o * L + l for l in range(L) for o in range(32)],
                    dtype=np.int32)
    lin1_w = lin1_w[perm, :].astype(jnp.bfloat16)
    lin1_b = jnp.zeros((1, hidden), jnp.float32)

    # --- lin2 padded to a lane-dense class axis; dummy classes get -1e30 bias
    #     so exp() underflows to 0 and log_softmax over real classes is exact.
    lin2_w = _glorot(keys[next(ki)], (hidden, num_classes))
    lin2_w = jnp.pad(lin2_w, ((0, 0), (0, _CLASS_PAD - num_classes))
                     ).astype(jnp.bfloat16)
    lin2_b = (jnp.full((_CLASS_PAD,), _NEG_PAD, jnp.float32)
              .at[:num_classes].set(0.0).reshape(1, _CLASS_PAD))

    return {"sage": sage, "conv1d_w": conv1d_w, "conv1d_b": conv1d_b,
            "lin1_w": lin1_w, "lin1_b": lin1_b,
            "lin2_w": lin2_w, "lin2_b": lin2_b}


# ---------------------------------------------------------------------------
if __name__ == "__main__":
    # model config (small, consistent with the module)
    num_features = 16
    hidden = 32
    num_layers = 3
    k = 7
    num_classes = 8

    # graph batch: 16 graphs, 12 nodes each (2 grid steps of 8 in the head)
    num_graphs = 16
    nodes_per_graph = 12
    n_total = num_graphs * nodes_per_graph
    batch_np = np.repeat(np.arange(num_graphs), nodes_per_graph).astype(np.int32)

    key = jax.random.PRNGKey(0)
    x = jax.random.normal(key, (n_total, num_features), dtype=jnp.float32)

    # deterministic random intra-graph edges
    rng = np.random.RandomState(0)
    edges = []
    for g in range(num_graphs):
        lo = g * nodes_per_graph
        src = rng.randint(lo, lo + nodes_per_graph, size=40)
        dst = rng.randint(lo, lo + nodes_per_graph, size=40)
        edges.append(np.stack([src, dst]))
    edge_index = np.concatenate(edges, axis=1)

    # dense mean-normalized adjacency (aggregate source feats at target,
    # mean over in-edges)
    A = np.zeros((n_total, n_total), np.float32)
    np.add.at(A, (edge_index[1], edge_index[0]), 1.0)
    deg = A.sum(axis=1, keepdims=True)
    a_norm = jnp.asarray(A / np.maximum(deg, 1.0))

    params = make_params(num_features, hidden, num_layers, k, num_classes)
    batch = jnp.asarray(batch_np)

    out = sortpool_forward(
        x, a_norm, batch, params,
        num_graphs=num_graphs, max_nodes=nodes_per_graph, k=k,
        num_classes=num_classes, hidden=hidden)
    out = jax.block_until_ready(out)

    assert out.shape == (num_graphs, num_classes)
    # log_softmax rows must sum to ~1 in prob space
    assert np.allclose(np.exp(np.asarray(out)).sum(axis=-1), 1.0, atol=1e-4)
    print("KERNEL_OK")
</pallas_src>

<mosaic_0001>
module attributes {stable_mosaic.version = 11 : i64} {
  func.func @kernel(%arg0: memref<192x192xbf16, #tpu.memory_space<vmem>>, %arg1: memref<192x16xf32, #tpu.memory_space<vmem>>, %arg2: memref<16x32xbf16, #tpu.memory_space<vmem>>, %arg3: memref<16x32xbf16, #tpu.memory_space<vmem>>, %arg4: memref<1x32xf32, #tpu.memory_space<vmem>>, %arg5: memref<32x32xbf16, #tpu.memory_space<vmem>>, %arg6: memref<32x32xbf16, #tpu.memory_space<vmem>>, %arg7: memref<1x32xf32, #tpu.memory_space<vmem>>, %arg8: memref<32x128xbf16, #tpu.memory_space<vmem>>, %arg9: memref<32x128xbf16, #tpu.memory_space<vmem>>, %arg10: memref<1x128xf32, #tpu.memory_space<vmem>>, %arg11: memref<192x128xf32, #tpu.memory_space<vmem>>) attributes {dimension_semantics = [], scalar_prefetch = 0 : i64, scratch_operands = 0 : i64, tpu.core_type = #tpu.core_type<tc>} {
    %c0 = arith.constant 0 : index
    %c0_0 = arith.constant 0 : index
    %0 = vector.load %arg0[%c0, %c0_0] : memref<192x192xbf16, #tpu.memory_space<vmem>>, vector<192x192xbf16>
    %c0_1 = arith.constant 0 : index
    %c0_2 = arith.constant 0 : index
    %1 = vector.load %arg1[%c0_1, %c0_2] : memref<192x16xf32, #tpu.memory_space<vmem>>, vector<192x16xf32>
    %c0_3 = arith.constant 0 : index
    %c0_4 = arith.constant 0 : index
    %2 = vector.load %arg2[%c0_3, %c0_4] : memref<16x32xbf16, #tpu.memory_space<vmem>>, vector<16x32xbf16>
    %c0_5 = arith.constant 0 : index
    %c0_6 = arith.constant 0 : index
    %3 = vector.load %arg3[%c0_5, %c0_6] : memref<16x32xbf16, #tpu.memory_space<vmem>>, vector<16x32xbf16>
    %c0_7 = arith.constant 0 : index
    %c0_8 = arith.constant 0 : index
    %4 = vector.load %arg4[%c0_7, %c0_8] : memref<1x32xf32, #tpu.memory_space<vmem>>, vector<1x32xf32>
    %5 = arith.truncf %1 : vector<192x16xf32> to vector<192x16xbf16>
    %cst = arith.constant dense<0.000000e+00> : vector<192x16xf32>
    %6 = tpu.matmul %0, %5, %cst {dimension_numbers = #tpu.dot_dimension_numbers<[1], [0], [0], [1], [0, 0, 1, 1], [], []>} : vector<192x192xbf16>, vector<192x16xbf16>, vector<192x16xf32> -> vector<192x16xf32>
    %7 = arith.truncf %6 : vector<192x16xf32> to vector<192x16xbf16>
    %cst_9 = arith.constant dense<0.000000e+00> : vector<192x32xf32>
    %8 = tpu.matmul %7, %2, %cst_9 {dimension_numbers = #tpu.dot_dimension_numbers<[1], [0], [0], [1], [0, 0, 1, 1], [], []>} : vector<192x16xbf16>, vector<16x32xbf16>, vector<192x32xf32> -> vector<192x32xf32>
    %cst_10 = arith.constant dense<0.000000e+00> : vector<192x32xf32>
    %9 = tpu.matmul %5, %3, %cst_10 {dimension_numbers = #tpu.dot_dimension_numbers<[1], [0], [0], [1], [0, 0, 1, 1], [], []>} : vector<192x16xbf16>, vector<16x32xbf16>, vector<192x32xf32> -> vector<192x32xf32>
    %10 = arith.addf %8, %9 : vector<192x32xf32>
    %11 = vector.broadcast %4 : vector<1x32xf32> to vector<192x32xf32>
    %12 = arith.addf %10, %11 : vector<192x32xf32>
    %cst_11 = arith.constant 0.000000e+00 : f32
    %13 = vector.broadcast %cst_11 : f32 to vector<192x32xf32>
    %14 = arith.maximumf %12, %13 : vector<192x32xf32>
    %c0_12 = arith.constant 0 : index
    %c0_13 = arith.constant 0 : index
    %15 = vector.load %arg5[%c0_12, %c0_13] : memref<32x32xbf16, #tpu.memory_space<vmem>>, vector<32x32xbf16>
    %c0_14 = arith.constant 0 : index
    %c0_15 = arith.constant 0 : index
    %16 = vector.load %arg6[%c0_14, %c0_15] : memref<32x32xbf16, #tpu.memory_space<vmem>>, vector<32x32xbf16>
    %c0_16 = arith.constant 0 : index
    %c0_17 = arith.constant 0 : index
    %17 = vector.load %arg7[%c0_16, %c0_17] : memref<1x32xf32, #tpu.memory_space<vmem>>, vector<1x32xf32>
    %18 = arith.truncf %14 : vector<192x32xf32> to vector<192x32xbf16>
    %cst_18 = arith.constant dense<0.000000e+00> : vector<192x32xf32>
    %19 = tpu.matmul %0, %18, %cst_18 {dimension_numbers = #tpu.dot_dimension_numbers<[1], [0], [0], [1], [0, 0, 1, 1], [], []>} : vector<192x192xbf16>, vector<192x32xbf16>, vector<192x32xf32> -> vector<192x32xf32>
    %20 = arith.truncf %19 : vector<192x32xf32> to vector<192x32xbf16>
    %cst_19 = arith.constant dense<0.000000e+00> : vector<192x32xf32>
    %21 = tpu.matmul %20, %15, %cst_19 {dimension_numbers = #tpu.dot_dimension_numbers<[1], [0], [0], [1], [0, 0, 1, 1], [], []>} : vector<192x32xbf16>, vector<32x32xbf16>, vector<192x32xf32> -> vector<192x32xf32>
    %cst_20 = arith.constant dense<0.000000e+00> : vector<192x32xf32>
    %22 = tpu.matmul %18, %16, %cst_20 {dimension_numbers = #tpu.dot_dimension_numbers<[1], [0], [0], [1], [0, 0, 1, 1], [], []>} : vector<192x32xbf16>, vector<32x32xbf16>, vector<192x32xf32> -> vector<192x32xf32>
    %23 = arith.addf %21, %22 : vector<192x32xf32>
    %24 = vector.broadcast %17 : vector<1x32xf32> to vector<192x32xf32>
    %25 = arith.addf %23, %24 : vector<192x32xf32>
    %cst_21 = arith.constant 0.000000e+00 : f32
    %26 = vector.broadcast %cst_21 : f32 to vector<192x32xf32>
    %27 = arith.maximumf %25, %26 : vector<192x32xf32>
    %c0_22 = arith.constant 0 : index
    %c0_23 = arith.constant 0 : index
    %28 = vector.load %arg8[%c0_22, %c0_23] : memref<32x128xbf16, #tpu.memory_space<vmem>>, vector<32x128xbf16>
    %c0_24 = arith.constant 0 : index
    %c0_25 = arith.constant 0 : index
    %29 = vector.load %arg9[%c0_24, %c0_25] : memref<32x128xbf16, #tpu.memory_space<vmem>>, vector<32x128xbf16>
    %c0_26 = arith.constant 0 : index
    %c0_27 = arith.constant 0 : index
    %30 = vector.load %arg10[%c0_26, %c0_27] : memref<1x128xf32, #tpu.memory_space<vmem>>, vector<1x128xf32>
    %31 = arith.truncf %27 : vector<192x32xf32> to vector<192x32xbf16>
    %cst_28 = arith.constant dense<0.000000e+00> : vector<192x32xf32>
    %32 = tpu.matmul %0, %31, %cst_28 {dimension_numbers = #tpu.dot_dimension_numbers<[1], [0], [0], [1], [0, 0, 1, 1], [], []>} : vector<192x192xbf16>, vector<192x32xbf16>, vector<192x32xf32> -> vector<192x32xf32>
    %33 = arith.truncf %32 : vector<192x32xf32> to vector<192x32xbf16>
    %cst_29 = arith.constant dense<0.000000e+00> : vector<192x128xf32>
    %34 = tpu.matmul %33, %28, %cst_29 {dimension_numbers = #tpu.dot_dimension_numbers<[1], [0], [0], [1], [0, 0, 1, 1], [], []>} : vector<192x32xbf16>, vector<32x128xbf16>, vector<192x128xf32> -> vector<192x128xf32>
    %cst_30 = arith.constant dense<0.000000e+00> : vector<192x128xf32>
    %35 = tpu.matmul %31, %29, %cst_30 {dimension_numbers = #tpu.dot_dimension_numbers<[1], [0], [0], [1], [0, 0, 1, 1], [], []>} : vector<192x32xbf16>, vector<32x128xbf16>, vector<192x128xf32> -> vector<192x128xf32>
    %36 = arith.addf %34, %35 : vector<192x128xf32>
    %37 = vector.broadcast %30 : vector<1x128xf32> to vector<192x128xf32>
    %38 = arith.addf %36, %37 : vector<192x128xf32>
    %cst_31 = arith.constant 0.000000e+00 : f32
    %39 = vector.broadcast %cst_31 : f32 to vector<192x128xf32>
    %40 = arith.maximumf %38, %39 : vector<192x128xf32>
    %c0_32 = arith.constant 0 : index
    %c0_33 = arith.constant 0 : index
    %41 = vector.load %arg11[%c0_32, %c0_33] : memref<192x128xf32, #tpu.memory_space<vmem>>, vector<192x128xf32>
    tpu.vector_store %arg11[%c0_32, %c0_33], %40 {strides = array<i32>} : memref<192x128xf32, #tpu.memory_space<vmem>>, vector<192x128xf32>,
    return
  }
}

</mosaic_0001>

<llo_original>
// kernel: tpu_custom_call.1
$region0: #{tpu_custom_call.1}
  #allocation0 [shape = 'u32[]', space=smem, size = 0x4, offset = 0x4, fixed_abs, tag = 'smem constant byte address 0x4 - core index']
  #allocation1 [shape = 'u32[72,128]{1,0:T(1,128)}', space=vmem, size = 0x9000, scoped, tag = 'internal scratch']
  %s0 = inlined_call_operand.vmem [shape: bf16[192,192], index: 0, kind: input, shape index: {}]
  %s1 = inlined_call_operand.vmem [shape: f32[192,16], index: 1, kind: input, shape index: {}]
  %s2 = inlined_call_operand.hbm [shape: bf16[16,32], index: 2, kind: input, shape index: {}]
  %s3 = inlined_call_operand.hbm [shape: bf16[16,32], index: 3, kind: input, shape index: {}]
  %s4 = inlined_call_operand.vmem [shape: f32[1,32], index: 4, kind: input, shape index: {}]
  %s5 = inlined_call_operand.vmem [shape: bf16[32,32], index: 5, kind: input, shape index: {}]
  %s6 = inlined_call_operand.vmem [shape: bf16[32,32], index: 6, kind: input, shape index: {}]
  %s7 = inlined_call_operand.vmem [shape: f32[1,32], index: 7, kind: input, shape index: {}]
  %s8 = inlined_call_operand.hbm [shape: bf16[32,128], index: 8, kind: input, shape index: {}]
  %s9 = inlined_call_operand.hbm [shape: bf16[32,128], index: 9, kind: input, shape index: {}]
  %s10 = inlined_call_operand.vmem [shape: f32[1,128], index: 10, kind: input, shape index: {}]
  %s11 = inlined_call_operand.hbm [shape: f32[192,128], index: 11, kind: output, shape index: {}]
  %s12 = sld [smem:[#allocation0]]
  $region70: #{tpu_custom_call.1} parent=0
    _
  %s14 = ssub.s32 1, %s12
  %s15 = scalar_select 0, %s14, %s12
  $region1: #{tpu_custom_call.1} parent=0
    #allocation2 [shape = 'u8[4096]{0}', space=vmem, size = 0x1000, scoped, tag = 'input window, operand 2, single buffered']
    #allocation3 [shape = 's32[1]{0}', space=sflag, size = 0x4, scoped, tag = 'scoped memory for tpu_custom_call.1']
    #allocation4 [shape = 's32[1]{0}', space=sflag, size = 0x4, scoped, tag = 'scoped memory for tpu_custom_call.1']
    #allocation5 [shape = 'u8[4096]{0}', space=vmem, size = 0x1000, scoped, tag = 'input window, operand 3, single buffered']
    #allocation6 [shape = 's32[1]{0}', space=sflag, size = 0x4, scoped, tag = 'scoped memory for tpu_custom_call.1']
    #allocation7 [shape = 'u8[8192]{0}', space=vmem, size = 0x2000, scoped, tag = 'input window, operand 8, single buffered']
    #allocation8 [shape = 'u8[8192]{0}', space=vmem, size = 0x2000, scoped, tag = 'input window, operand 9, single buffered']
    #allocation9 [shape = 's32[1]{0}', space=sflag, size = 0x4, scoped, tag = 'scoped memory for tpu_custom_call.1']
    #allocation10 [shape = 'u8[98304]{0}', space=vmem, size = 0x18000, scoped, tag = 'output window, operand 0, single buffered']
    %16 = vsyncpa [#allocation3], 0
    %17 = vsyncpa [#allocation6], 0
    %18 = vsyncpa [#allocation9], 0
    %19 = vsyncpa [#allocation4], 0
    // Predicated region
    $region2: #{tpu_custom_call.1} parent=1 // pred_check
      _
    $region3: #{tpu_custom_call.1} parent=1 // pred_check_branch
      %21 = sbr.rel (0) target = $region5
    $region4: #{tpu_custom_call.1} parent=1 // pred_region
      _
    $region5: #{tpu_custom_call.1} parent=1 // pred_fallthru
      _
    // Predicated region
    $region6: #{tpu_custom_call.1} parent=1 // pred_check
      _
    $region7: #{tpu_custom_call.1} parent=1 // pred_check_branch
      %23 = sbr.rel (0) target = $region9
    $region8: #{tpu_custom_call.1} parent=1 // pred_region
      _
    $region9: #{tpu_custom_call.1} parent=1 // pred_fallthru
      _
    // Predicated region
    $region10: #{tpu_custom_call.1} parent=1 // pred_check
      _
    $region11: #{tpu_custom_call.1} parent=1 // pred_check_branch
      %25 = sbr.rel (0) target = $region13
    $region12: #{tpu_custom_call.1} parent=1 // pred_region
      %27 = vsyncadd [#allocation3], 0
      %s28 = sshll.u32 %s2, 4
      %s29 = int_to_ptr.hbm [resolvable:$true] %s28
      %s30 = sshll.u32 [#allocation2], 4
      %s31 = int_to_ptr.vmem [resolvable:$true] %s30
      %36 = dma.hbm_to_vmem [thread:$0]  %s29, 128, %s31, [#allocation3], 64, 64, 4
    $region13: #{tpu_custom_call.1} parent=1 // pred_fallthru
      _
    // Predicated region
    $region14: #{tpu_custom_call.1} parent=1 // pred_check
      _
    $region15: #{tpu_custom_call.1} parent=1 // pred_check_branch
      %38 = sbr.rel (0) target = $region17
    $region16: #{tpu_custom_call.1} parent=1 // pred_region
      %40 = vsyncadd [#allocation6], 0
      %s41 = sshll.u32 %s3, 4
      %s42 = int_to_ptr.hbm [resolvable:$true] %s41
      %s43 = sshll.u32 [#allocation5], 4
      %s44 = int_to_ptr.vmem [resolvable:$true] %s43
      %49 = dma.hbm_to_vmem [thread:$0]  %s42, 128, %s44, [#allocation6], 64, 64, 4
    $region17: #{tpu_custom_call.1} parent=1 // pred_fallthru
      _
    // Predicated region
    $region18: #{tpu_custom_call.1} parent=1 // pred_check
      _
    $region19: #{tpu_custom_call.1} parent=1 // pred_check_branch
      %51 = sbr.rel (0) target = $region21
    $region20: #{tpu_custom_call.1} parent=1 // pred_region
      _
    $region21: #{tpu_custom_call.1} parent=1 // pred_fallthru
      _
    // Predicated region
    $region22: #{tpu_custom_call.1} parent=1 // pred_check
      _
    $region23: #{tpu_custom_call.1} parent=1 // pred_check_branch
      %53 = sbr.rel (0) target = $region25
    $region24: #{tpu_custom_call.1} parent=1 // pred_region
      _
    $region25: #{tpu_custom_call.1} parent=1 // pred_fallthru
      _
    // Predicated region
    $region26: #{tpu_custom_call.1} parent=1 // pred_check
      _
    $region27: #{tpu_custom_call.1} parent=1 // pred_check_branch
      %55 = sbr.rel (0) target = $region29
    $region28: #{tpu_custom_call.1} parent=1 // pred_region
      _
    $region29: #{tpu_custom_call.1} parent=1 // pred_fallthru
      _
    // Predicated region
    $region30: #{tpu_custom_call.1} parent=1 // pred_check
      _
    $region31: #{tpu_custom_call.1} parent=1 // pred_check_branch
      %57 = sbr.rel (0) target = $region33
    $region32: #{tpu_custom_call.1} parent=1 // pred_region
      _
    $region33: #{tpu_custom_call.1} parent=1 // pred_fallthru
      _
    // Predicated region
    $region34: #{tpu_custom_call.1} parent=1 // pred_check
      _
    $region35: #{tpu_custom_call.1} parent=1 // pred_check_branch
      %59 = sbr.rel (0) target = $region37
    $region36: #{tpu_custom_call.1} parent=1 // pred_region
      %61 = vsyncadd [#allocation6], 0
      %s62 = sshll.u32 %s8, 4
      %s63 = int_to_ptr.hbm [resolvable:$true] %s62
      %s64 = sshll.u32 [#allocation7], 4
      %s65 = int_to_ptr.vmem [resolvable:$true] %s64
      %70 = dma.hbm_to_vmem [thread:$0]  %s63, 256, %s65, [#allocation6], 64, 64, 4
    $region37: #{tpu_custom_call.1} parent=1 // pred_fallthru
      _
    // Predicated region
    $region38: #{tpu_custom_call.1} parent=1 // pred_check
      _
    $region39: #{tpu_custom_call.1} parent=1 // pred_check_branch
      %72 = sbr.rel (0) target = $region41
    $region40: #{tpu_custom_call.1} parent=1 // pred_region
      %74 = vsyncadd [#allocation9], 0
      %s75 = sshll.u32 %s9, 4
      %s76 = int_to_ptr.hbm [resolvable:$true] %s75
      %s77 = sshll.u32 [#allocation8], 4
      %s78 = int_to_ptr.vmem [resolvable:$true] %s77
      %83 = dma.hbm_to_vmem [thread:$0]  %s76, 256, %s78, [#allocation9], 64, 64, 4
    $region41: #{tpu_custom_call.1} parent=1 // pred_fallthru
      _
    // Predicated region
    $region42: #{tpu_custom_call.1} parent=1 // pred_check
      _
    $region43: #{tpu_custom_call.1} parent=1 // pred_check_branch
      %85 = sbr.rel (0) target = $region45
    $region44: #{tpu_custom_call.1} parent=1 // pred_region
      _
    $region45: #{tpu_custom_call.1} parent=1 // pred_fallthru
      _
    // Predicated region
    $region46: #{tpu_custom_call.1} parent=1 // pred_check
      _
    $region47: #{tpu_custom_call.1} parent=1 // pred_check_branch
      %87 = sbr.rel (0) target = $region49
    $region48: #{tpu_custom_call.1} parent=1 // pred_region
      %89 = dma.done [#allocation3], 128
    $region49: #{tpu_custom_call.1} parent=1 // pred_fallthru
      _
    // Predicated region
    $region50: #{tpu_custom_call.1} parent=1 // pred_check
      _
    $region51: #{tpu_custom_call.1} parent=1 // pred_check_branch
      %91 = sbr.rel (0) target = $region53
    $region52: #{tpu_custom_call.1} parent=1 // pred_region
      %93 = dma.done [#allocation6], 128
    $region53: #{tpu_custom_call.1} parent=1 // pred_fallthru
      _
    // Predicated region
    $region54: #{tpu_custom_call.1} parent=1 // pred_check
      _
    $region55: #{tpu_custom_call.1} parent=1 // pred_check_branch
      %95 = sbr.rel (0) target = $region57
    $region56: #{tpu_custom_call.1} parent=1 // pred_region
      %97 = dma.done [#allocation6], 256
    $region57: #{tpu_custom_call.1} parent=1 // pred_fallthru
      _
    // Predicated region
    $region58: #{tpu_custom_call.1} parent=1 // pred_check
      _
    $region59: #{tpu_custom_call.1} parent=1 // pred_check_branch
      %99 = sbr.rel (0) target = $region61
    $region60: #{tpu_custom_call.1} parent=1 // pred_region
      %101 = dma.done [#allocation9], 256
    $region61: #{tpu_custom_call.1} parent=1 // pred_fallthru
      _
    %v103 = vld [vmem:[%s0] sm:$0xff]
    %v104 = vld [vmem:[%s0 + $0x8] sm:$0xff]
    %v105 = vld [vmem:[%s0 + $0x10] sm:$0xff]
    %v106 = vld [vmem:[%s0 + $0x18] sm:$0xff]
    %v107 = vld [vmem:[%s0 + $0x20] sm:$0xff]
    %v108 = vld [vmem:[%s0 + $0x28] sm:$0xff]
    %v109 = vld [vmem:[%s0 + $0x30] sm:$0xff]
    %v110 = vld [vmem:[%s0 + $0x38] sm:$0xff]
    %v111 = vld [vmem:[%s0 + $0x40] sm:$0xff]
    %v112 = vld [vmem:[%s0 + $0x48] sm:$0xff]
    %v113 = vld [vmem:[%s0 + $0x50] sm:$0xff]
    %v114 = vld [vmem:[%s0 + $0x58] sm:$0xff]
    %v115 = vld [vmem:[%s0 + $0x60] sm:$0xff]
    %v116 = vld [vmem:[%s0 + $0x68] sm:$0xff]
    %v117 = vld [vmem:[%s0 + $0x70] sm:$0xff]
    %v118 = vld [vmem:[%s0 + $0x78] sm:$0xff]
    %v119 = vld [vmem:[%s0 + $0x80] sm:$0xff]
    %v120 = vld [vmem:[%s0 + $0x88] sm:$0xff]
    %v121 = vld [vmem:[%s0 + $0x90] sm:$0xff]
    %v122 = vld [vmem:[%s0 + $0x98] sm:$0xff]
    %v123 = vld [vmem:[%s0 + $0xa0] sm:$0xff]
    %v124 = vld [vmem:[%s0 + $0xa8] sm:$0xff]
    %v125 = vld [vmem:[%s0 + $0xb0] sm:$0xff]
    %v126 = vld [vmem:[%s0 + $0xb8] sm:$0xff]
    %v127 = vld [vmem:[%s1] sm:$0xff]
    %v128 = vld [vmem:[%s1 + $0x8] sm:$0xff]
    %v129 = vld [vmem:[%s1 + $0x10] sm:$0xff]
    %v130 = vld [vmem:[%s1 + $0x18] sm:$0xff]
    %v131 = vld [vmem:[%s1 + $0x20] sm:$0xff]
    %v132 = vld [vmem:[%s1 + $0x28] sm:$0xff]
    %v133 = vld [vmem:[%s1 + $0x30] sm:$0xff]
    %v134 = vld [vmem:[%s1 + $0x38] sm:$0xff]
    %v135 = vld [vmem:[%s1 + $0x40] sm:$0xff]
    %v136 = vld [vmem:[%s1 + $0x48] sm:$0xff]
    %v137 = vld [vmem:[%s1 + $0x50] sm:$0xff]
    %v138 = vld [vmem:[%s1 + $0x58] sm:$0xff]
    %v139 = vld [vmem:[%s1 + $0x60] sm:$0xff]
    %v140 = vld [vmem:[%s1 + $0x68] sm:$0xff]
    %v141 = vld [vmem:[%s1 + $0x70] sm:$0xff]
    %v142 = vld [vmem:[%s1 + $0x78] sm:$0xff]
    %v143 = vld [vmem:[%s1 + $0x80] sm:$0xff]
    %v144 = vld [vmem:[%s1 + $0x88] sm:$0xff]
    %v145 = vld [vmem:[%s1 + $0x90] sm:$0xff]
    %v146 = vld [vmem:[%s1 + $0x98] sm:$0xff]
    %v147 = vld [vmem:[%s1 + $0xa0] sm:$0xff]
    %v148 = vld [vmem:[%s1 + $0xa8] sm:$0xff]
    %v149 = vld [vmem:[%s1 + $0xb0] sm:$0xff]
    %v150 = vld [vmem:[%s1 + $0xb8] sm:$0xff]
    %v151 = vld [vmem:[#allocation2] sm:$0xf]
    %v152 = vld [vmem:[#allocation2 + $0x4] sm:$0xf]
    %v153 = vld [vmem:[#allocation5] sm:$0xf]
    %v154 = vld [vmem:[#allocation5 + $0x4] sm:$0xf]
    %v155 = vld [vmem:[%s4] sm:$0x1]
    %v156 = vpack.c.bf16 %v128, %v127
    %v157 = vpack.c.bf16 %v130, %v129
    %v158 = vpack.c.bf16 %v132, %v131
    %v159 = vpack.c.bf16 %v134, %v133
    %v160 = vpack.c.bf16 %v136, %v135
    %v161 = vpack.c.bf16 %v138, %v137
    %v162 = vpack.c.bf16 %v140, %v139
    %v163 = vpack.c.bf16 %v142, %v141
    %v164 = vpack.c.bf16 %v144, %v143
    %v165 = vpack.c.bf16 %v146, %v145
    %v166 = vpack.c.bf16 %v148, %v147
    %v167 = vpack.c.bf16 %v150, %v149
    %v192 = vunpack.c.l.b16 %v103
    %v193 = vunpack.c.h.b16 %v103
    %v194 = vunpack.c.l.b16 %v104
    %v195 = vunpack.c.h.b16 %v104
    %v196 = vunpack.c.l.b16 %v105
    %v197 = vunpack.c.h.b16 %v105
    %v198 = vunpack.c.l.b16 %v106
    %v199 = vunpack.c.h.b16 %v106
    %v200 = vunpack.c.l.b16 %v107
    %v201 = vunpack.c.h.b16 %v107
    %v202 = vunpack.c.l.b16 %v108
    %v203 = vunpack.c.h.b16 %v108
    %v204 = vunpack.c.l.b16 %v109
    %v205 = vunpack.c.h.b16 %v109
    %v206 = vunpack.c.l.b16 %v110
    %v207 = vunpack.c.h.b16 %v110
    %v208 = vunpack.c.l.b16 %v111
    %v209 = vunpack.c.h.b16 %v111
    %v210 = vunpack.c.l.b16 %v112
    %v211 = vunpack.c.h.b16 %v112
    %v212 = vunpack.c.l.b16 %v113
    %v213 = vunpack.c.h.b16 %v113
    %v214 = vunpack.c.l.b16 %v114
    %v215 = vunpack.c.h.b16 %v114
    %v216 = vunpack.c.l.b16 %v115
    %v217 = vunpack.c.h.b16 %v115
    %v218 = vunpack.c.l.b16 %v116
    %v219 = vunpack.c.h.b16 %v116
    %v220 = vunpack.c.l.b16 %v117
    %v221 = vunpack.c.h.b16 %v117
    %v222 = vunpack.c.l.b16 %v118
    %v223 = vunpack.c.h.b16 %v118
    %v224 = vunpack.c.l.b16 %v119
    %v225 = vunpack.c.h.b16 %v119
    %v226 = vunpack.c.l.b16 %v120
    %v227 = vunpack.c.h.b16 %v120
    %v228 = vunpack.c.l.b16 %v121
    %v229 = vunpack.c.h.b16 %v121
    %v230 = vunpack.c.l.b16 %v122
    %v231 = vunpack.c.h.b16 %v122
    %v232 = vunpack.c.l.b16 %v123
    %v233 = vunpack.c.h.b16 %v123
    %v234 = vunpack.c.l.b16 %v124
    %v235 = vunpack.c.h.b16 %v124
    %v236 = vunpack.c.l.b16 %v125
    %v237 = vunpack.c.h.b16 %v125
    %v238 = vunpack.c.l.b16 %v126
    %v239 = vunpack.c.h.b16 %v126
    %v240 = vpack.c.b16 %v194, %v192
    %v241 = vpack.c.b16 %v195, %v193
    %v242 = vpack.c.b16 %v198, %v196
    %v243 = vpack.c.b16 %v199, %v197
    %v244 = vpack.c.b16 %v202, %v200
    %v245 = vpack.c.b16 %v203, %v201
    %v246 = vpack.c.b16 %v206, %v204
    %v247 = vpack.c.b16 %v207, %v205
    %v248 = vpack.c.b16 %v210, %v208
    %v249 = vpack.c.b16 %v211, %v209
    %v250 = vpack.c.b16 %v214, %v212
    %v251 = vpack.c.b16 %v215, %v213
    %v252 = vpack.c.b16 %v218, %v216
    %v253 = vpack.c.b16 %v219, %v217
    %v254 = vpack.c.b16 %v222, %v220
    %v255 = vpack.c.b16 %v223, %v221
    %v256 = vpack.c.b16 %v226, %v224
    %v257 = vpack.c.b16 %v227, %v225
    %v258 = vpack.c.b16 %v230, %v228
    %v259 = vpack.c.b16 %v231, %v229
    %v260 = vpack.c.b16 %v234, %v232
    %v261 = vpack.c.b16 %v235, %v233
    %v262 = vpack.c.b16 %v238, %v236
    %v263 = vpack.c.b16 %v239, %v237
    %vm276 = vcmask 523264
    %v278 = vsel %vm276, %v241, 0
    %v281 = vsel %vm276, %v243, 0
    %v284 = vsel %vm276, %v245, 0
    %v287 = vsel %vm276, %v247, 0
    %v290 = vsel %vm276, %v249, 0
    %v293 = vsel %vm276, %v251, 0
    %v296 = vsel %vm276, %v253, 0
    %v299 = vsel %vm276, %v255, 0
    %v302 = vsel %vm276, %v257, 0
    %v305 = vsel %vm276, %v259, 0
    %v308 = vsel %vm276, %v261, 0
    %v311 = vsel %vm276, %v263, 0
    %313 = vmatpush.bf16.msra.mxu0 %v163
    %314 = vmatpush.bf16.msra.mxu0 %v162
    %315 = vmatpush.bf16.msra.mxu0 %v161
    %316 = vmatpush.bf16.msra.mxu0 %v160
    %317 = vmatpush.bf16.msra.mxu0 %v159
    %318 = vmatpush.bf16.msra.mxu0 %v158
    %319 = vmatpush.bf16.msra.mxu0 %v157
    %320 = vmatpush.bf16.msra.mxu0 %v156
    %321 = vmatmul.bf16.gmra.mxu0 %v240
    %v322 = vpop.f32.mrf.mxu0
    %v323 = vadd.f32 0.0, %v322
    %v324 = vpop.f32.mrf.mxu0
    %v325 = vadd.f32 0.0, %v324
    %326 = vmatmul.bf16.gmra.mxu0 %v242
    %v327 = vpop.f32.mrf.mxu0
    %v328 = vadd.f32 0.0, %v327
    %v329 = vpop.f32.mrf.mxu0
    %v330 = vadd.f32 0.0, %v329
    %331 = vmatmul.bf16.gmra.mxu0 %v244
    %v332 = vpop.f32.mrf.mxu0
    %v333 = vadd.f32 0.0, %v332
    %v334 = vpop.f32.mrf.mxu0
    %v335 = vadd.f32 0.0, %v334
    %336 = vmatmul.bf16.gmra.mxu0 %v246
    %v337 = vpop.f32.mrf.mxu0
    %v338 = vadd.f32 0.0, %v337
    %v339 = vpop.f32.mrf.mxu0
    %v340 = vadd.f32 0.0, %v339
    %341 = vmatmul.bf16.gmra.mxu0 %v248
    %v342 = vpop.f32.mrf.mxu0
    %v343 = vadd.f32 0.0, %v342
    %v344 = vpop.f32.mrf.mxu0
    %v345 = vadd.f32 0.0, %v344
    %346 = vmatmul.bf16.gmra.mxu0 %v250
    %v347 = vpop.f32.mrf.mxu0
    %v348 = vadd.f32 0.0, %v347
    %v349 = vpop.f32.mrf.mxu0
    %v350 = vadd.f32 0.0, %v349
    %351 = vmatmul.bf16.gmra.mxu0 %v252
    %v352 = vpop.f32.mrf.mxu0
    %v353 = vadd.f32 0.0, %v352
    %v354 = vpop.f32.mrf.mxu0
    %v355 = vadd.f32 0.0, %v354
    %356 = vmatmul.bf16.gmra.mxu0 %v254
    %v357 = vpop.f32.mrf.mxu0
    %v358 = vadd.f32 0.0, %v357
    %v359 = vpop.f32.mrf.mxu0
    %v360 = vadd.f32 0.0, %v359
    %361 = vmatmul.bf16.gmra.mxu0 %v256
    %v362 = vpop.f32.mrf.mxu0
    %v363 = vadd.f32 0.0, %v362
    %v364 = vpop.f32.mrf.mxu0
    %v365 = vadd.f32 0.0, %v364
    %366 = vmatmul.bf16.gmra.mxu0 %v258
    %v367 = vpop.f32.mrf.mxu0
    %v368 = vadd.f32 0.0, %v367
    %v369 = vpop.f32.mrf.mxu0
    %v370 = vadd.f32 0.0, %v369
    %371 = vmatmul.bf16.gmra.mxu0 %v260
    %v372 = vpop.f32.mrf.mxu0
    %v373 = vadd.f32 0.0, %v372
    %v374 = vpop.f32.mrf.mxu0
    %v375 = vadd.f32 0.0, %v374
    %376 = vmatmul.bf16.gmra.mxu0 %v262
    %v377 = vpop.f32.mrf.mxu0
    %v378 = vadd.f32 0.0, %v377
    %v379 = vpop.f32.mrf.mxu0
    %v380 = vadd.f32 0.0, %v379
    %381 = vdwg.mxu0
    %382 = vmatpush.bf16.msra.mxu0 0
    %383 = vmatpush.bf16.msra.mxu0 0
    %384 = vmatpush.bf16.msra.mxu0 0
    %385 = vmatpush.bf16.msra.mxu0 0
    %386 = vmatpush.bf16.msra.mxu0 %v167
    %387 = vmatpush.bf16.msra.mxu0 %v166
    %388 = vmatpush.bf16.msra.mxu0 %v165
    %389 = vmatpush.bf16.msra.mxu0 %v164
    %390 = vmatmul.bf16.gmra.mxu0 %v278
    %v391 = vpop.f32.mrf.mxu0
    %v392 = vadd.f32 %v323, %v391
    %v393 = vpop.f32.mrf.mxu0
    %v394 = vadd.f32 %v325, %v393
    %395 = vmatmul.bf16.gmra.mxu0 %v281
    %v396 = vpop.f32.mrf.mxu0
    %v397 = vadd.f32 %v328, %v396
    %v398 = vpop.f32.mrf.mxu0
    %v399 = vadd.f32 %v330, %v398
    %400 = vmatmul.bf16.gmra.mxu0 %v284
    %v401 = vpop.f32.mrf.mxu0
    %v402 = vadd.f32 %v333, %v401
    %v403 = vpop.f32.mrf.mxu0
    %v404 = vadd.f32 %v335, %v403
    %405 = vmatmul.bf16.gmra.mxu0 %v287
    %v406 = vpop.f32.mrf.mxu0
    %v407 = vadd.f32 %v338, %v406
    %v408 = vpop.f32.mrf.mxu0
    %v409 = vadd.f32 %v340, %v408
    %410 = vmatmul.bf16.gmra.mxu0 %v290
    %v411 = vpop.f32.mrf.mxu0
    %v412 = vadd.f32 %v343, %v411
    %v413 = vpop.f32.mrf.mxu0
    %v414 = vadd.f32 %v345, %v413
    %415 = vmatmul.bf16.gmra.mxu0 %v293
    %v416 = vpop.f32.mrf.mxu0
    %v417 = vadd.f32 %v348, %v416
    %v418 = vpop.f32.mrf.mxu0
    %v419 = vadd.f32 %v350, %v418
    %420 = vmatmul.bf16.gmra.mxu0 %v296
    %v421 = vpop.f32.mrf.mxu0
    %v422 = vadd.f32 %v353, %v421
    %v423 = vpop.f32.mrf.mxu0
    %v424 = vadd.f32 %v355, %v423
    %425 = vmatmul.bf16.gmra.mxu0 %v299
    %v426 = vpop.f32.mrf.mxu0
    %v427 = vadd.f32 %v358, %v426
    %v428 = vpop.f32.mrf.mxu0
    %v429 = vadd.f32 %v360, %v428
    %430 = vmatmul.bf16.gmra.mxu0 %v302
    %v431 = vpop.f32.mrf.mxu0
    %v432 = vadd.f32 %v363, %v431
    %v433 = vpop.f32.mrf.mxu0
    %v434 = vadd.f32 %v365, %v433
    %435 = vmatmul.bf16.gmra.mxu0 %v305
    %v436 = vpop.f32.mrf.mxu0
    %v437 = vadd.f32 %v368, %v436
    %v438 = vpop.f32.mrf.mxu0
    %v439 = vadd.f32 %v370, %v438
    %440 = vmatmul.bf16.gmra.mxu0 %v308
    %v441 = vpop.f32.mrf.mxu0
    %v442 = vadd.f32 %v373, %v441
    %v443 = vpop.f32.mrf.mxu0
    %v444 = vadd.f32 %v375, %v443
    %445 = vmatmul.bf16.gmra.mxu0 %v311
    %v446 = vpop.f32.mrf.mxu0
    %v447 = vadd.f32 %v378, %v446
    %v448 = vpop.f32.mrf.mxu0
    %v449 = vadd.f32 %v380, %v448
    %450 = vdwg.mxu0
    %v451 = vpack.c.bf16 %v394, %v392
    %v452 = vpack.c.bf16 %v399, %v397
    %v453 = vpack.c.bf16 %v404, %v402
    %v454 = vpack.c.bf16 %v409, %v407
    %v455 = vpack.c.bf16 %v414, %v412
    %v456 = vpack.c.bf16 %v419, %v417
    %v457 = vpack.c.bf16 %v424, %v422
    %v458 = vpack.c.bf16 %v429, %v427
    %v459 = vpack.c.bf16 %v434, %v432
    %v460 = vpack.c.bf16 %v439, %v437
    %v461 = vpack.c.bf16 %v444, %v442
    %v462 = vpack.c.bf16 %v449, %v447
    %v465 = vunpack.c.l.b16 %v153
    %v466 = vunpack.c.l.b16 %v154
    %v467 = vpack.c.b16 %v466, %v465
    %vm469 = vcmask 130048
    %v471 = vsel %vm469, %v156, 0
    %v474 = vsel %vm469, %v157, 0
    %v477 = vsel %vm469, %v158, 0
    %v480 = vsel %vm469, %v159, 0
    %v483 = vsel %vm469, %v160, 0
    %v486 = vsel %vm469, %v161, 0
    %v489 = vsel %vm469, %v162, 0
    %v492 = vsel %vm469, %v163, 0
    %v495 = vsel %vm469, %v164, 0
    %v498 = vsel %vm469, %v165, 0
    %v501 = vsel %vm469, %v166, 0
    %v504 = vsel %vm469, %v167, 0
    %506 = vmatpush.bf16.msra.mxu0 0
    %507 = vmatpush.bf16.msra.mxu0 0
    %508 = vmatpush.bf16.msra.mxu0 0
    %509 = vmatpush.bf16.msra.mxu0 0
    %510 = vmatpush.bf16.msra.mxu0 0
    %511 = vmatpush.bf16.msra.mxu0 0
    %512 = vmatpush.bf16.msra.mxu0 0
    %513 = vmatpush.bf16.msra.mxu0 %v467
    %514 = vmatmul.bf16.gmra.mxu0 %v471
    %v515 = vpop.f32.mrf.mxu0
    %v516 = vadd.f32 0.0, %v515
    %v517 = vpop.f32.mrf.mxu0
    %v518 = vadd.f32 0.0, %v517
    %519 = vmatmul.bf16.gmra.mxu0 %v474
    %v520 = vpop.f32.mrf.mxu0
    %v521 = vadd.f32 0.0, %v520
    %v522 = vpop.f32.mrf.mxu0
    %v523 = vadd.f32 0.0, %v522
    %524 = vmatmul.bf16.gmra.mxu0 %v477
    %v525 = vpop.f32.mrf.mxu0
    %v526 = vadd.f32 0.0, %v525
    %v527 = vpop.f32.mrf.mxu0
    %v528 = vadd.f32 0.0, %v527
    %529 = vmatmul.bf16.gmra.mxu0 %v480
    %v530 = vpop.f32.mrf.mxu0
    %v531 = vadd.f32 0.0, %v530
    %v532 = vpop.f32.mrf.mxu0
    %v533 = vadd.f32 0.0, %v532
    %534 = vmatmul.bf16.gmra.mxu0 %v483
    %v535 = vpop.f32.mrf.mxu0
    %v536 = vadd.f32 0.0, %v535
    %v537 = vpop.f32.mrf.mxu0
    %v538 = vadd.f32 0.0, %v537
    %539 = vmatmul.bf16.gmra.mxu0 %v486
    %v540 = vpop.f32.mrf.mxu0
    %v541 = vadd.f32 0.0, %v540
    %v542 = vpop.f32.mrf.mxu0
    %v543 = vadd.f32 0.0, %v542
    %544 = vmatmul.bf16.gmra.mxu0 %v489
    %v545 = vpop.f32.mrf.mxu0
    %v546 = vadd.f32 0.0, %v545
    %v547 = vpop.f32.mrf.mxu0
    %v548 = vadd.f32 0.0, %v547
    %549 = vmatmul.bf16.gmra.mxu0 %v492
    %v550 = vpop.f32.mrf.mxu0
    %v551 = vadd.f32 0.0, %v550
    %v552 = vpop.f32.mrf.mxu0
    %v553 = vadd.f32 0.0, %v552
    %554 = vmatmul.bf16.gmra.mxu0 %v495
    %v555 = vpop.f32.mrf.mxu0
    %v556 = vadd.f32 0.0, %v555
    %v557 = vpop.f32.mrf.mxu0
    %v558 = vadd.f32 0.0, %v557
    %559 = vmatmul.bf16.gmra.mxu0 %v498
    %v560 = vpop.f32.mrf.mxu0
    %v561 = vadd.f32 0.0, %v560
    %v562 = vpop.f32.mrf.mxu0
    %v563 = vadd.f32 0.0, %v562
    %564 = vmatmul.bf16.gmra.mxu0 %v501
    %v565 = vpop.f32.mrf.mxu0
    %v566 = vadd.f32 0.0, %v565
    %v567 = vpop.f32.mrf.mxu0
    %v568 = vadd.f32 0.0, %v567
    %569 = vmatmul.bf16.gmra.mxu0 %v504
    %v570 = vpop.f32.mrf.mxu0
    %v571 = vadd.f32 0.0, %v570
    %v572 = vpop.f32.mrf.mxu0
    %v573 = vadd.f32 0.0, %v572
    %574 = vdwg.mxu0
    %v577 = vunpack.c.l.b16 %v151
    %v578 = vunpack.c.l.b16 %v152
    %v579 = vpack.c.b16 %v578, %v577
    %v582 = vsel %vm469, %v451, 0
    %v585 = vsel %vm469, %v452, 0
    %v588 = vsel %vm469, %v453, 0
    %v591 = vsel %vm469, %v454, 0
    %v594 = vsel %vm469, %v455, 0
    %v597 = vsel %vm469, %v456, 0
    %v600 = vsel %vm469, %v457, 0
    %v603 = vsel %vm469, %v458, 0
    %v606 = vsel %vm469, %v459, 0
    %v609 = vsel %vm469, %v460, 0
    %v612 = vsel %vm469, %v461, 0
    %v615 = vsel %vm469, %v462, 0
    %617 = vmatpush.bf16.msra.mxu0 0
    %618 = vmatpush.bf16.msra.mxu0 0
    %619 = vmatpush.bf16.msra.mxu0 0
    %620 = vmatpush.bf16.msra.mxu0 0
    %621 = vmatpush.bf16.msra.mxu0 0
    %622 = vmatpush.bf16.msra.mxu0 0
    %623 = vmatpush.bf16.msra.mxu0 0
    %624 = vmatpush.bf16.msra.mxu0 %v579
    %625 = vmatmul.bf16.gmra.mxu0 %v582
    %v626 = vpop.f32.mrf.mxu0
    %v627 = vadd.f32 %v516, %v626
    %v628 = vpop.f32.mrf.mxu0
    %v629 = vadd.f32 %v518, %v628
    %630 = vmatmul.bf16.gmra.mxu0 %v585
    %v631 = vpop.f32.mrf.mxu0
    %v632 = vadd.f32 %v521, %v631
    %v633 = vpop.f32.mrf.mxu0
    %v634 = vadd.f32 %v523, %v633
    %635 = vmatmul.bf16.gmra.mxu0 %v588
    %v636 = vpop.f32.mrf.mxu0
    %v637 = vadd.f32 %v526, %v636
    %v638 = vpop.f32.mrf.mxu0
    %v639 = vadd.f32 %v528, %v638
    %640 = vmatmul.bf16.gmra.mxu0 %v591
    %v641 = vpop.f32.mrf.mxu0
    %v642 = vadd.f32 %v531, %v641
    %v643 = vpop.f32.mrf.mxu0
    %v644 = vadd.f32 %v533, %v643
    %645 = vmatmul.bf16.gmra.mxu0 %v594
    %v646 = vpop.f32.mrf.mxu0
    %v647 = vadd.f32 %v536, %v646
    %v648 = vpop.f32.mrf.mxu0
    %v649 = vadd.f32 %v538, %v648
    %650 = vmatmul.bf16.gmra.mxu0 %v597
    %v651 = vpop.f32.mrf.mxu0
    %v652 = vadd.f32 %v541, %v651
    %v653 = vpop.f32.mrf.mxu0
    %v654 = vadd.f32 %v543, %v653
    %655 = vmatmul.bf16.gmra.mxu0 %v600
    %v656 = vpop.f32.mrf.mxu0
    %v657 = vadd.f32 %v546, %v656
    %v658 = vpop.f32.mrf.mxu0
    %v659 = vadd.f32 %v548, %v658
    %660 = vmatmul.bf16.gmra.mxu0 %v603
    %v661 = vpop.f32.mrf.mxu0
    %v662 = vadd.f32 %v551, %v661
    %v663 = vpop.f32.mrf.mxu0
    %v664 = vadd.f32 %v553, %v663
    %665 = vmatmul.bf16.gmra.mxu0 %v606
    %v666 = vpop.f32.mrf.mxu0
    %v667 = vadd.f32 %v556, %v666
    %v668 = vpop.f32.mrf.mxu0
    %v669 = vadd.f32 %v558, %v668
    %670 = vmatmul.bf16.gmra.mxu0 %v609
    %v671 = vpop.f32.mrf.mxu0
    %v672 = vadd.f32 %v561, %v671
    %v673 = vpop.f32.mrf.mxu0
    %v674 = vadd.f32 %v563, %v673
    %675 = vmatmul.bf16.gmra.mxu0 %v612
    %v676 = vpop.f32.mrf.mxu0
    %v677 = vadd.f32 %v566, %v676
    %v678 = vpop.f32.mrf.mxu0
    %v679 = vadd.f32 %v568, %v678
    %680 = vmatmul.bf16.gmra.mxu0 %v615
    %v681 = vpop.f32.mrf.mxu0
    %v682 = vadd.f32 %v571, %v681
    %v683 = vpop.f32.mrf.mxu0
    %v684 = vadd.f32 %v573, %v683
    %685 = vdwg.mxu0
    %v687 = vperm.slane %v155, 0
    %v689 = vadd.f32 %v627, %v687
    %v690 = vadd.f32 %v629, %v687
    %v691 = vadd.f32 %v632, %v687
    %v692 = vadd.f32 %v634, %v687
    %v693 = vadd.f32 %v637, %v687
    %v694 = vadd.f32 %v639, %v687
    %v695 = vadd.f32 %v642, %v687
    %v696 = vadd.f32 %v644, %v687
    %v697 = vadd.f32 %v647, %v687
    %v698 = vadd.f32 %v649, %v687
    %v699 = vadd.f32 %v652, %v687
    %v700 = vadd.f32 %v654, %v687
    %v701 = vadd.f32 %v657, %v687
    %v702 = vadd.f32 %v659, %v687
    %v703 = vadd.f32 %v662, %v687
    %v704 = vadd.f32 %v664, %v687
    %v705 = vadd.f32 %v667, %v687
    %v706 = vadd.f32 %v669, %v687
    %v707 = vadd.f32 %v672, %v687
    %v708 = vadd.f32 %v674, %v687
    %v709 = vadd.f32 %v677, %v687
    %v710 = vadd.f32 %v679, %v687
    %v711 = vadd.f32 %v682, %v687
    %v712 = vadd.f32 %v684, %v687
    %v713 = vmax.f32 %v689, 0.0
    %v714 = vmax.f32 %v690, 0.0
    %v715 = vmax.f32 %v691, 0.0
    %v716 = vmax.f32 %v692, 0.0
    %v717 = vmax.f32 %v693, 0.0
    %v718 = vmax.f32 %v694, 0.0
    %v719 = vmax.f32 %v695, 0.0
    %v720 = vmax.f32 %v696, 0.0
    %v721 = vmax.f32 %v697, 0.0
    %v722 = vmax.f32 %v698, 0.0
    %v723 = vmax.f32 %v699, 0.0
    %v724 = vmax.f32 %v700, 0.0
    %v725 = vmax.f32 %v701, 0.0
    %v726 = vmax.f32 %v702, 0.0
    %v727 = vmax.f32 %v703, 0.0
    %v728 = vmax.f32 %v704, 0.0
    %v729 = vmax.f32 %v705, 0.0
    %v730 = vmax.f32 %v706, 0.0
    %v731 = vmax.f32 %v707, 0.0
    %v732 = vmax.f32 %v708, 0.0
    %v733 = vmax.f32 %v709, 0.0
    %v734 = vmax.f32 %v710, 0.0
    %v735 = vmax.f32 %v711, 0.0
    %v736 = vmax.f32 %v712, 0.0
    %v737 = vld [vmem:[%s5] sm:$0xf]
    %v738 = vld [vmem:[%s5 + $0x4] sm:$0xf]
    %v739 = vld [vmem:[%s5 + $0x8] sm:$0xf]
    %v740 = vld [vmem:[%s5 + $0xc] sm:$0xf]
    %v741 = vld [vmem:[%s6] sm:$0xf]
    %v742 = vld [vmem:[%s6 + $0x4] sm:$0xf]
    %v743 = vld [vmem:[%s6 + $0x8] sm:$0xf]
    %v744 = vld [vmem:[%s6 + $0xc] sm:$0xf]
    %v745 = vld [vmem:[%s7] sm:$0x1]
    %v746 = vpack.c.bf16 %v714, %v713
    %v747 = vpack.c.bf16 %v716, %v715
    %v748 = vpack.c.bf16 %v718, %v717
    %v749 = vpack.c.bf16 %v720, %v719
    %v750 = vpack.c.bf16 %v722, %v721
    %v751 = vpack.c.bf16 %v724, %v723
    %v752 = vpack.c.bf16 %v726, %v725
    %v753 = vpack.c.bf16 %v728, %v727
    %v754 = vpack.c.bf16 %v730, %v729
    %v755 = vpack.c.bf16 %v732, %v731
    %v756 = vpack.c.bf16 %v734, %v733
    %v757 = vpack.c.bf16 %v736, %v735
    %758 = vmatpush.bf16.msra.mxu0 %v753
    %759 = vmatpush.bf16.msra.mxu0 %v752
    %760 = vmatpush.bf16.msra.mxu0 %v751
    %761 = vmatpush.bf16.msra.mxu0 %v750
    %762 = vmatpush.bf16.msra.mxu0 %v749
    %763 = vmatpush.bf16.msra.mxu0 %v748
    %764 = vmatpush.bf16.msra.mxu0 %v747
    %765 = vmatpush.bf16.msra.mxu0 %v746
    %766 = vmatmul.bf16.gmra.mxu0 %v240
    %v767 = vpop.f32.mrf.mxu0
    %v768 = vadd.f32 0.0, %v767
    %v769 = vpop.f32.mrf.mxu0
    %v770 = vadd.f32 0.0, %v769
    %771 = vmatmul.bf16.gmra.mxu0 %v242
    %v772 = vpop.f32.mrf.mxu0
    %v773 = vadd.f32 0.0, %v772
    %v774 = vpop.f32.mrf.mxu0
    %v775 = vadd.f32 0.0, %v774
    %776 = vmatmul.bf16.gmra.mxu0 %v244
    %v777 = vpop.f32.mrf.mxu0
    %v778 = vadd.f32 0.0, %v777
    %v779 = vpop.f32.mrf.mxu0
    %v780 = vadd.f32 0.0, %v779
    %781 = vmatmul.bf16.gmra.mxu0 %v246
    %v782 = vpop.f32.mrf.mxu0
    %v783 = vadd.f32 0.0, %v782
    %v784 = vpop.f32.mrf.mxu0
    %v785 = vadd.f32 0.0, %v784
    %786 = vmatmul.bf16.gmra.mxu0 %v248
    %v787 = vpop.f32.mrf.mxu0
    %v788 = vadd.f32 0.0, %v787
    %v789 = vpop.f32.mrf.mxu0
    %v790 = vadd.f32 0.0, %v789
    %791 = vmatmul.bf16.gmra.mxu0 %v250
    %v792 = vpop.f32.mrf.mxu0
    %v793 = vadd.f32 0.0, %v792
    %v794 = vpop.f32.mrf.mxu0
    %v795 = vadd.f32 0.0, %v794
    %796 = vmatmul.bf16.gmra.mxu0 %v252
    %v797 = vpop.f32.mrf.mxu0
    %v798 = vadd.f32 0.0, %v797
    %v799 = vpop.f32.mrf.mxu0
    %v800 = vadd.f32 0.0, %v799
    %801 = vmatmul.bf16.gmra.mxu0 %v254
    %v802 = vpop.f32.mrf.mxu0
    %v803 = vadd.f32 0.0, %v802
    %v804 = vpop.f32.mrf.mxu0
    %v805 = vadd.f32 0.0, %v804
    %806 = vmatmul.bf16.gmra.mxu0 %v256
    %v807 = vpop.f32.mrf.mxu0
    %v808 = vadd.f32 0.0, %v807
    %v809 = vpop.f32.mrf.mxu0
    %v810 = vadd.f32 0.0, %v809
    %811 = vmatmul.bf16.gmra.mxu0 %v258
    %v812 = vpop.f32.mrf.mxu0
    %v813 = vadd.f32 0.0, %v812
    %v814 = vpop.f32.mrf.mxu0
    %v815 = vadd.f32 0.0, %v814
    %816 = vmatmul.bf16.gmra.mxu0 %v260
    %v817 = vpop.f32.mrf.mxu0
    %v818 = vadd.f32 0.0, %v817
    %v819 = vpop.f32.mrf.mxu0
    %v820 = vadd.f32 0.0, %v819
    %821 = vmatmul.bf16.gmra.mxu0 %v262
    %v822 = vpop.f32.mrf.mxu0
    %v823 = vadd.f32 0.0, %v822
    %v824 = vpop.f32.mrf.mxu0
    %v825 = vadd.f32 0.0, %v824
    %826 = vdwg.mxu0
    %827 = vmatpush.bf16.msra.mxu0 0
    %828 = vmatpush.bf16.msra.mxu0 0
    %829 = vmatpush.bf16.msra.mxu0 0
    %830 = vmatpush.bf16.msra.mxu0 0
    %831 = vmatpush.bf16.msra.mxu0 %v757
    %832 = vmatpush.bf16.msra.mxu0 %v756
    %833 = vmatpush.bf16.msra.mxu0 %v755
    %834 = vmatpush.bf16.msra.mxu0 %v754
    %835 = vmatmul.bf16.gmra.mxu0 %v278
    %v836 = vpop.f32.mrf.mxu0
    %v837 = vadd.f32 %v768, %v836
    %v838 = vpop.f32.mrf.mxu0
    %v839 = vadd.f32 %v770, %v838
    %840 = vmatmul.bf16.gmra.mxu0 %v281
    %v841 = vpop.f32.mrf.mxu0
    %v842 = vadd.f32 %v773, %v841
    %v843 = vpop.f32.mrf.mxu0
    %v844 = vadd.f32 %v775, %v843
    %845 = vmatmul.bf16.gmra.mxu0 %v284
    %v846 = vpop.f32.mrf.mxu0
    %v847 = vadd.f32 %v778, %v846
    %v848 = vpop.f32.mrf.mxu0
    %v849 = vadd.f32 %v780, %v848
    %850 = vmatmul.bf16.gmra.mxu0 %v287
    %v851 = vpop.f32.mrf.mxu0
    %v852 = vadd.f32 %v783, %v851
    %v853 = vpop.f32.mrf.mxu0
    %v854 = vadd.f32 %v785, %v853
    %855 = vmatmul.bf16.gmra.mxu0 %v290
    %v856 = vpop.f32.mrf.mxu0
    %v857 = vadd.f32 %v788, %v856
    %v858 = vpop.f32.mrf.mxu0
    %v859 = vadd.f32 %v790, %v858
    %860 = vmatmul.bf16.gmra.mxu0 %v293
    %v861 = vpop.f32.mrf.mxu0
    %v862 = vadd.f32 %v793, %v861
    %v863 = vpop.f32.mrf.mxu0
    %v864 = vadd.f32 %v795, %v863
    %865 = vmatmul.bf16.gmra.mxu0 %v296
    %v866 = vpop.f32.mrf.mxu0
    %v867 = vadd.f32 %v798, %v866
    %v868 = vpop.f32.mrf.mxu0
    %v869 = vadd.f32 %v800, %v868
    %870 = vmatmul.bf16.gmra.mxu0 %v299
    %v871 = vpop.f32.mrf.mxu0
    %v872 = vadd.f32 %v803, %v871
    %v873 = vpop.f32.mrf.mxu0
    %v874 = vadd.f32 %v805, %v873
    %875 = vmatmul.bf16.gmra.mxu0 %v302
    %v876 = vpop.f32.mrf.mxu0
    %v877 = vadd.f32 %v808, %v876
    %v878 = vpop.f32.mrf.mxu0
    %v879 = vadd.f32 %v810, %v878
    %880 = vmatmul.bf16.gmra.mxu0 %v305
    %v881 = vpop.f32.mrf.mxu0
    %v882 = vadd.f32 %v813, %v881
    %v883 = vpop.f32.mrf.mxu0
    %v884 = vadd.f32 %v815, %v883
    %885 = vmatmul.bf16.gmra.mxu0 %v308
    %v886 = vpop.f32.mrf.mxu0
    %v887 = vadd.f32 %v818, %v886
    %v888 = vpop.f32.mrf.mxu0
    %v889 = vadd.f32 %v820, %v888
    %890 = vmatmul.bf16.gmra.mxu0 %v311
    %v891 = vpop.f32.mrf.mxu0
    %v892 = vadd.f32 %v823, %v891
    %v893 = vpop.f32.mrf.mxu0
    %v894 = vadd.f32 %v825, %v893
    %895 = vdwg.mxu0
    %v896 = vpack.c.bf16 %v839, %v837
    %v897 = vpack.c.bf16 %v844, %v842
    %v898 = vpack.c.bf16 %v849, %v847
    %v899 = vpack.c.bf16 %v854, %v852
    %v900 = vpack.c.bf16 %v859, %v857
    %v901 = vpack.c.bf16 %v864, %v862
    %v902 = vpack.c.bf16 %v869, %v867
    %v903 = vpack.c.bf16 %v874, %v872
    %v904 = vpack.c.bf16 %v879, %v877
    %v905 = vpack.c.bf16 %v884, %v882
    %v906 = vpack.c.bf16 %v889, %v887
    %v907 = vpack.c.bf16 %v894, %v892
    %v912 = vunpack.c.l.b16 %v741
    %v913 = vunpack.c.l.b16 %v742
    %v914 = vunpack.c.l.b16 %v743
    %v915 = vunpack.c.l.b16 %v744
    %v916 = vpack.c.b16 %v913, %v912
    %v917 = vpack.c.b16 %v915, %v914
    %vm920 = vcmask 261120
    %v922 = vsel %vm920, %v746, 0
    %v925 = vsel %vm920, %v747, 0
    %v928 = vsel %vm920, %v748, 0
    %v931 = vsel %vm920, %v749, 0
    %v934 = vsel %vm920, %v750, 0
    %v937 = vsel %vm920, %v751, 0
    %v940 = vsel %vm920, %v752, 0
    %v943 = vsel %vm920, %v753, 0
    %v946 = vsel %vm920, %v754, 0
    %v949 = vsel %vm920, %v755, 0
    %v952 = vsel %vm920, %v756, 0
    %v955 = vsel %vm920, %v757, 0
    %957 = vmatpush.bf16.msra.mxu0 0
    %958 = vmatpush.bf16.msra.mxu0 0
    %959 = vmatpush.bf16.msra.mxu0 0
    %960 = vmatpush.bf16.msra.mxu0 0
    %961 = vmatpush.bf16.msra.mxu0 0
    %962 = vmatpush.bf16.msra.mxu0 0
    %963 = vmatpush.bf16.msra.mxu0 %v917
    %964 = vmatpush.bf16.msra.mxu0 %v916
    %965 = vmatmul.bf16.gmra.mxu0 %v922
    %v966 = vpop.f32.mrf.mxu0
    %v967 = vadd.f32 0.0, %v966
    %v968 = vpop.f32.mrf.mxu0
    %v969 = vadd.f32 0.0, %v968
    %970 = vmatmul.bf16.gmra.mxu0 %v925
    %v971 = vpop.f32.mrf.mxu0
    %v972 = vadd.f32 0.0, %v971
    %v973 = vpop.f32.mrf.mxu0
    %v974 = vadd.f32 0.0, %v973
    %975 = vmatmul.bf16.gmra.mxu0 %v928
    %v976 = vpop.f32.mrf.mxu0
    %v977 = vadd.f32 0.0, %v976
    %v978 = vpop.f32.mrf.mxu0
    %v979 = vadd.f32 0.0, %v978
    %980 = vmatmul.bf16.gmra.mxu0 %v931
    %v981 = vpop.f32.mrf.mxu0
    %v982 = vadd.f32 0.0, %v981
    %v983 = vpop.f32.mrf.mxu0
    %v984 = vadd.f32 0.0, %v983
    %985 = vmatmul.bf16.gmra.mxu0 %v934
    %v986 = vpop.f32.mrf.mxu0
    %v987 = vadd.f32 0.0, %v986
    %v988 = vpop.f32.mrf.mxu0
    %v989 = vadd.f32 0.0, %v988
    %990 = vmatmul.bf16.gmra.mxu0 %v937
    %v991 = vpop.f32.mrf.mxu0
    %v992 = vadd.f32 0.0, %v991
    %v993 = vpop.f32.mrf.mxu0
    %v994 = vadd.f32 0.0, %v993
    %995 = vmatmul.bf16.gmra.mxu0 %v940
    %v996 = vpop.f32.mrf.mxu0
    %v997 = vadd.f32 0.0, %v996
    %v998 = vpop.f32.mrf.mxu0
    %v999 = vadd.f32 0.0, %v998
    %1000 = vmatmul.bf16.gmra.mxu0 %v943
    %v1001 = vpop.f32.mrf.mxu0
    %v1002 = vadd.f32 0.0, %v1001
    %v1003 = vpop.f32.mrf.mxu0
    %v1004 = vadd.f32 0.0, %v1003
    %1005 = vmatmul.bf16.gmra.mxu0 %v946
    %v1006 = vpop.f32.mrf.mxu0
    %v1007 = vadd.f32 0.0, %v1006
    %v1008 = vpop.f32.mrf.mxu0
    %v1009 = vadd.f32 0.0, %v1008
    %1010 = vmatmul.bf16.gmra.mxu0 %v949
    %v1011 = vpop.f32.mrf.mxu0
    %v1012 = vadd.f32 0.0, %v1011
    %v1013 = vpop.f32.mrf.mxu0
    %v1014 = vadd.f32 0.0, %v1013
    %1015 = vmatmul.bf16.gmra.mxu0 %v952
    %v1016 = vpop.f32.mrf.mxu0
    %v1017 = vadd.f32 0.0, %v1016
    %v1018 = vpop.f32.mrf.mxu0
    %v1019 = vadd.f32 0.0, %v1018
    %1020 = vmatmul.bf16.gmra.mxu0 %v955
    %v1021 = vpop.f32.mrf.mxu0
    %v1022 = vadd.f32 0.0, %v1021
    %v1023 = vpop.f32.mrf.mxu0
    %v1024 = vadd.f32 0.0, %v1023
    %1025 = vdwg.mxu0
    %v1030 = vunpack.c.l.b16 %v737
    %v1031 = vunpack.c.l.b16 %v738
    %v1032 = vunpack.c.l.b16 %v739
    %v1033 = vunpack.c.l.b16 %v740
    %v1034 = vpack.c.b16 %v1031, %v1030
    %v1035 = vpack.c.b16 %v1033, %v1032
    %v1039 = vsel %vm920, %v896, 0
    %v1042 = vsel %vm920, %v897, 0
    %v1045 = vsel %vm920, %v898, 0
    %v1048 = vsel %vm920, %v899, 0
    %v1051 = vsel %vm920, %v900, 0
    %v1054 = vsel %vm920, %v901, 0
    %v1057 = vsel %vm920, %v902, 0
    %v1060 = vsel %vm920, %v903, 0
    %v1063 = vsel %vm920, %v904, 0
    %v1066 = vsel %vm920, %v905, 0
    %v1069 = vsel %vm920, %v906, 0
    %v1072 = vsel %vm920, %v907, 0
    %1074 = vmatpush.bf16.msra.mxu0 0
    %1075 = vmatpush.bf16.msra.mxu0 0
    %1076 = vmatpush.bf16.msra.mxu0 0
    %1077 = vmatpush.bf16.msra.mxu0 0
    %1078 = vmatpush.bf16.msra.mxu0 0
    %1079 = vmatpush.bf16.msra.mxu0 0
    %1080 = vmatpush.bf16.msra.mxu0 %v1035
    %1081 = vmatpush.bf16.msra.mxu0 %v1034
    %1082 = vmatmul.bf16.gmra.mxu0 %v1039
    %v1083 = vpop.f32.mrf.mxu0
    %v1084 = vadd.f32 %v967, %v1083
    %v1085 = vpop.f32.mrf.mxu0
    %v1086 = vadd.f32 %v969, %v1085
    %1087 = vmatmul.bf16.gmra.mxu0 %v1042
    %v1088 = vpop.f32.mrf.mxu0
    %v1089 = vadd.f32 %v972, %v1088
    %v1090 = vpop.f32.mrf.mxu0
    %v1091 = vadd.f32 %v974, %v1090
    %1092 = vmatmul.bf16.gmra.mxu0 %v1045
    %v1093 = vpop.f32.mrf.mxu0
    %v1094 = vadd.f32 %v977, %v1093
    %v1095 = vpop.f32.mrf.mxu0
    %v1096 = vadd.f32 %v979, %v1095
    %1097 = vmatmul.bf16.gmra.mxu0 %v1048
    %v1098 = vpop.f32.mrf.mxu0
    %v1099 = vadd.f32 %v982, %v1098
    %v1100 = vpop.f32.mrf.mxu0
    %v1101 = vadd.f32 %v984, %v1100
    %1102 = vmatmul.bf16.gmra.mxu0 %v1051
    %v1103 = vpop.f32.mrf.mxu0
    %v1104 = vadd.f32 %v987, %v1103
    %v1105 = vpop.f32.mrf.mxu0
    %v1106 = vadd.f32 %v989, %v1105
    %1107 = vmatmul.bf16.gmra.mxu0 %v1054
    %v1108 = vpop.f32.mrf.mxu0
    %v1109 = vadd.f32 %v992, %v1108
    %v1110 = vpop.f32.mrf.mxu0
    %v1111 = vadd.f32 %v994, %v1110
    %1112 = vmatmul.bf16.gmra.mxu0 %v1057
    %v1113 = vpop.f32.mrf.mxu0
    %v1114 = vadd.f32 %v997, %v1113
    %v1115 = vpop.f32.mrf.mxu0
    %v1116 = vadd.f32 %v999, %v1115
    %1117 = vmatmul.bf16.gmra.mxu0 %v1060
    %v1118 = vpop.f32.mrf.mxu0
    %v1119 = vadd.f32 %v1002, %v1118
    %v1120 = vpop.f32.mrf.mxu0
    %v1121 = vadd.f32 %v1004, %v1120
    %1122 = vmatmul.bf16.gmra.mxu0 %v1063
    %v1123 = vpop.f32.mrf.mxu0
    %v1124 = vadd.f32 %v1007, %v1123
    %v1125 = vpop.f32.mrf.mxu0
    %v1126 = vadd.f32 %v1009, %v1125
    %1127 = vmatmul.bf16.gmra.mxu0 %v1066
    %v1128 = vpop.f32.mrf.mxu0
    %v1129 = vadd.f32 %v1012, %v1128
    %v1130 = vpop.f32.mrf.mxu0
    %v1131 = vadd.f32 %v1014, %v1130
    %1132 = vmatmul.bf16.gmra.mxu0 %v1069
    %v1133 = vpop.f32.mrf.mxu0
    %v1134 = vadd.f32 %v1017, %v1133
    %v1135 = vpop.f32.mrf.mxu0
    %v1136 = vadd.f32 %v1019, %v1135
    %1137 = vmatmul.bf16.gmra.mxu0 %v1072
    %v1138 = vpop.f32.mrf.mxu0
    %v1139 = vadd.f32 %v1022, %v1138
    %v1140 = vpop.f32.mrf.mxu0
    %v1141 = vadd.f32 %v1024, %v1140
    %1142 = vdwg.mxu0
    %v1144 = vperm.slane %v745, 0
    %v1146 = vadd.f32 %v1084, %v1144
    %v1147 = vadd.f32 %v1086, %v1144
    %v1148 = vadd.f32 %v1089, %v1144
    %v1149 = vadd.f32 %v1091, %v1144
    %v1150 = vadd.f32 %v1094, %v1144
    %v1151 = vadd.f32 %v1096, %v1144
    %v1152 = vadd.f32 %v1099, %v1144
    %v1153 = vadd.f32 %v1101, %v1144
    %v1154 = vadd.f32 %v1104, %v1144
    %v1155 = vadd.f32 %v1106, %v1144
    %v1156 = vadd.f32 %v1109, %v1144
    %v1157 = vadd.f32 %v1111, %v1144
    %v1158 = vadd.f32 %v1114, %v1144
    %v1159 = vadd.f32 %v1116, %v1144
    %v1160 = vadd.f32 %v1119, %v1144
    %v1161 = vadd.f32 %v1121, %v1144
    %v1162 = vadd.f32 %v1124, %v1144
    %v1163 = vadd.f32 %v1126, %v1144
    %v1164 = vadd.f32 %v1129, %v1144
    %v1165 = vadd.f32 %v1131, %v1144
    %v1166 = vadd.f32 %v1134, %v1144
    %v1167 = vadd.f32 %v1136, %v1144
    %v1168 = vadd.f32 %v1139, %v1144
    %v1169 = vadd.f32 %v1141, %v1144
    %v1170 = vmax.f32 %v1146, 0.0
    %v1171 = vmax.f32 %v1147, 0.0
    %v1172 = vmax.f32 %v1148, 0.0
    %v1173 = vmax.f32 %v1149, 0.0
    %v1174 = vmax.f32 %v1150, 0.0
    %v1175 = vmax.f32 %v1151, 0.0
    %v1176 = vmax.f32 %v1152, 0.0
    %v1177 = vmax.f32 %v1153, 0.0
    %v1178 = vmax.f32 %v1154, 0.0
    %v1179 = vmax.f32 %v1155, 0.0
    %v1180 = vmax.f32 %v1156, 0.0
    %v1181 = vmax.f32 %v1157, 0.0
    %v1182 = vmax.f32 %v1158, 0.0
    %v1183 = vmax.f32 %v1159, 0.0
    %v1184 = vmax.f32 %v1160, 0.0
    %v1185 = vmax.f32 %v1161, 0.0
    %v1186 = vmax.f32 %v1162, 0.0
    %v1187 = vmax.f32 %v1163, 0.0
    %v1188 = vmax.f32 %v1164, 0.0
    %v1189 = vmax.f32 %v1165, 0.0
    %v1190 = vmax.f32 %v1166, 0.0
    %v1191 = vmax.f32 %v1167, 0.0
    %v1192 = vmax.f32 %v1168, 0.0
    %v1193 = vmax.f32 %v1169, 0.0
    %v1194 = vld [vmem:[#allocation7] sm:$0xf]
    %v1195 = vld [vmem:[#allocation7 + $0x4] sm:$0xf]
    %v1196 = vld [vmem:[#allocation7 + $0x8] sm:$0xf]
    %v1197 = vld [vmem:[#allocation7 + $0xc] sm:$0xf]
    %v1198 = vld [vmem:[#allocation8] sm:$0xf]
    %v1199 = vld [vmem:[#allocation8 + $0x4] sm:$0xf]
    %v1200 = vld [vmem:[#allocation8 + $0x8] sm:$0xf]
    %v1201 = vld [vmem:[#allocation8 + $0xc] sm:$0xf]
    %v1202 = vld [vmem:[%s10] sm:$0x1]
    %v1203 = vpack.c.bf16 %v1171, %v1170
    %v1204 = vpack.c.bf16 %v1173, %v1172
    %v1205 = vpack.c.bf16 %v1175, %v1174
    %v1206 = vpack.c.bf16 %v1177, %v1176
    %v1207 = vpack.c.bf16 %v1179, %v1178
    %v1208 = vpack.c.bf16 %v1181, %v1180
    %v1209 = vpack.c.bf16 %v1183, %v1182
    %v1210 = vpack.c.bf16 %v1185, %v1184
    %v1211 = vpack.c.bf16 %v1187, %v1186
    %v1212 = vpack.c.bf16 %v1189, %v1188
    %v1213 = vpack.c.bf16 %v1191, %v1190
    %v1214 = vpack.c.bf16 %v1193, %v1192
    %1215 = vmatpush.bf16.msra.mxu0 %v1210
    %1216 = vmatpush.bf16.msra.mxu0 %v1209
    %1217 = vmatpush.bf16.msra.mxu0 %v1208
    %1218 = vmatpush.bf16.msra.mxu0 %v1207
    %1219 = vmatpush.bf16.msra.mxu0 %v1206
    %1220 = vmatpush.bf16.msra.mxu0 %v1205
    %1221 = vmatpush.bf16.msra.mxu0 %v1204
    %1222 = vmatpush.bf16.msra.mxu0 %v1203
    %1223 = vmatmul.bf16.gmra.mxu0 %v240
    %v1224 = vpop.f32.mrf.mxu0
    %v1225 = vadd.f32 0.0, %v1224
    %v1226 = vpop.f32.mrf.mxu0
    %v1227 = vadd.f32 0.0, %v1226
    %1228 = vmatmul.bf16.gmra.mxu0 %v242
    %v1229 = vpop.f32.mrf.mxu0
    %v1230 = vadd.f32 0.0, %v1229
    %v1231 = vpop.f32.mrf.mxu0
    %v1232 = vadd.f32 0.0, %v1231
    %1233 = vmatmul.bf16.gmra.mxu0 %v244
    %v1234 = vpop.f32.mrf.mxu0
    %v1235 = vadd.f32 0.0, %v1234
    %v1236 = vpop.f32.mrf.mxu0
    %v1237 = vadd.f32 0.0, %v1236
    %1238 = vmatmul.bf16.gmra.mxu0 %v246
    %v1239 = vpop.f32.mrf.mxu0
    %v1240 = vadd.f32 0.0, %v1239
    %v1241 = vpop.f32.mrf.mxu0
    %v1242 = vadd.f32 0.0, %v1241
    %1243 = vmatmul.bf16.gmra.mxu0 %v248
    %v1244 = vpop.f32.mrf.mxu0
    %v1245 = vadd.f32 0.0, %v1244
    %v1246 = vpop.f32.mrf.mxu0
    %v1247 = vadd.f32 0.0, %v1246
    %1248 = vmatmul.bf16.gmra.mxu0 %v250
    %v1249 = vpop.f32.mrf.mxu0
    %v1250 = vadd.f32 0.0, %v1249
    %v1251 = vpop.f32.mrf.mxu0
    %v1252 = vadd.f32 0.0, %v1251
    %1253 = vmatmul.bf16.gmra.mxu0 %v252
    %v1254 = vpop.f32.mrf.mxu0
    %v1255 = vadd.f32 0.0, %v1254
    %v1256 = vpop.f32.mrf.mxu0
    %v1257 = vadd.f32 0.0, %v1256
    %1258 = vmatmul.bf16.gmra.mxu0 %v254
    %v1259 = vpop.f32.mrf.mxu0
    %v1260 = vadd.f32 0.0, %v1259
    %v1261 = vpop.f32.mrf.mxu0
    %v1262 = vadd.f32 0.0, %v1261
    %1263 = vmatmul.bf16.gmra.mxu0 %v256
    %v1264 = vpop.f32.mrf.mxu0
    %v1265 = vadd.f32 0.0, %v1264
    %v1266 = vpop.f32.mrf.mxu0
    %v1267 = vadd.f32 0.0, %v1266
    %1268 = vmatmul.bf16.gmra.mxu0 %v258
    %v1269 = vpop.f32.mrf.mxu0
    %v1270 = vadd.f32 0.0, %v1269
    %v1271 = vpop.f32.mrf.mxu0
    %v1272 = vadd.f32 0.0, %v1271
    %1273 = vmatmul.bf16.gmra.mxu0 %v260
    %v1274 = vpop.f32.mrf.mxu0
    %v1275 = vadd.f32 0.0, %v1274
    %v1276 = vpop.f32.mrf.mxu0
    %v1277 = vadd.f32 0.0, %v1276
    %1278 = vmatmul.bf16.gmra.mxu0 %v262
    %v1279 = vpop.f32.mrf.mxu0
    %v1280 = vadd.f32 0.0, %v1279
    %v1281 = vpop.f32.mrf.mxu0
    %v1282 = vadd.f32 0.0, %v1281
    %1283 = vdwg.mxu0
    %1284 = vmatpush.bf16.msra.mxu0 0
    %1285 = vmatpush.bf16.msra.mxu0 0
    %1286 = vmatpush.bf16.msra.mxu0 0
    %1287 = vmatpush.bf16.msra.mxu0 0
    %1288 = vmatpush.bf16.msra.mxu0 %v1214
    %1289 = vmatpush.bf16.msra.mxu0 %v1213
    %1290 = vmatpush.bf16.msra.mxu0 %v1212
    %1291 = vmatpush.bf16.msra.mxu0 %v1211
    %1292 = vmatmul.bf16.gmra.mxu0 %v278
    %v1293 = vpop.f32.mrf.mxu0
    %v1294 = vadd.f32 %v1225, %v1293
    %v1295 = vpop.f32.mrf.mxu0
    %v1296 = vadd.f32 %v1227, %v1295
    %1297 = vmatmul.bf16.gmra.mxu0 %v281
    %v1298 = vpop.f32.mrf.mxu0
    %v1299 = vadd.f32 %v1230, %v1298
    %v1300 = vpop.f32.mrf.mxu0
    %v1301 = vadd.f32 %v1232, %v1300
    %1302 = vmatmul.bf16.gmra.mxu0 %v284
    %v1303 = vpop.f32.mrf.mxu0
    %v1304 = vadd.f32 %v1235, %v1303
    %v1305 = vpop.f32.mrf.mxu0
    %v1306 = vadd.f32 %v1237, %v1305
    %1307 = vmatmul.bf16.gmra.mxu0 %v287
    %v1308 = vpop.f32.mrf.mxu0
    %v1309 = vadd.f32 %v1240, %v1308
    %v1310 = vpop.f32.mrf.mxu0
    %v1311 = vadd.f32 %v1242, %v1310
    %1312 = vmatmul.bf16.gmra.mxu0 %v290
    %v1313 = vpop.f32.mrf.mxu0
    %v1314 = vadd.f32 %v1245, %v1313
    %v1315 = vpop.f32.mrf.mxu0
    %v1316 = vadd.f32 %v1247, %v1315
    %1317 = vmatmul.bf16.gmra.mxu0 %v293
    %v1318 = vpop.f32.mrf.mxu0
    %v1319 = vadd.f32 %v1250, %v1318
    %v1320 = vpop.f32.mrf.mxu0
    %v1321 = vadd.f32 %v1252, %v1320
    %1322 = vmatmul.bf16.gmra.mxu0 %v296
    %v1323 = vpop.f32.mrf.mxu0
    %v1324 = vadd.f32 %v1255, %v1323
    %v1325 = vpop.f32.mrf.mxu0
    %v1326 = vadd.f32 %v1257, %v1325
    %1327 = vmatmul.bf16.gmra.mxu0 %v299
    %v1328 = vpop.f32.mrf.mxu0
    %v1329 = vadd.f32 %v1260, %v1328
    %v1330 = vpop.f32.mrf.mxu0
    %v1331 = vadd.f32 %v1262, %v1330
    %1332 = vmatmul.bf16.gmra.mxu0 %v302
    %v1333 = vpop.f32.mrf.mxu0
    %v1334 = vadd.f32 %v1265, %v1333
    %v1335 = vpop.f32.mrf.mxu0
    %v1336 = vadd.f32 %v1267, %v1335
    %1337 = vmatmul.bf16.gmra.mxu0 %v305
    %v1338 = vpop.f32.mrf.mxu0
    %v1339 = vadd.f32 %v1270, %v1338
    %v1340 = vpop.f32.mrf.mxu0
    %v1341 = vadd.f32 %v1272, %v1340
    %1342 = vmatmul.bf16.gmra.mxu0 %v308
    %v1343 = vpop.f32.mrf.mxu0
    %v1344 = vadd.f32 %v1275, %v1343
    %v1345 = vpop.f32.mrf.mxu0
    %v1346 = vadd.f32 %v1277, %v1345
    %1347 = vmatmul.bf16.gmra.mxu0 %v311
    %v1348 = vpop.f32.mrf.mxu0
    %v1349 = vadd.f32 %v1280, %v1348
    %v1350 = vpop.f32.mrf.mxu0
    %v1351 = vadd.f32 %v1282, %v1350
    %1352 = vdwg.mxu0
    %v1353 = vpack.c.bf16 %v1296, %v1294
    %v1354 = vpack.c.bf16 %v1301, %v1299
    %v1355 = vpack.c.bf16 %v1306, %v1304
    %v1356 = vpack.c.bf16 %v1311, %v1309
    %v1357 = vpack.c.bf16 %v1316, %v1314
    %v1358 = vpack.c.bf16 %v1321, %v1319
    %v1359 = vpack.c.bf16 %v1326, %v1324
    %v1360 = vpack.c.bf16 %v1331, %v1329
    %v1361 = vpack.c.bf16 %v1336, %v1334
    %v1362 = vpack.c.bf16 %v1341, %v1339
    %v1363 = vpack.c.bf16 %v1346, %v1344
    %v1364 = vpack.c.bf16 %v1351, %v1349
    %v1369 = vunpack.c.l.b16 %v1198
    %v1370 = vunpack.c.l.b16 %v1199
    %v1371 = vunpack.c.l.b16 %v1200
    %v1372 = vunpack.c.l.b16 %v1201
    %v1373 = vpack.c.b16 %v1370, %v1369
    %v1374 = vpack.c.b16 %v1372, %v1371
    %v1378 = vsel %vm920, %v1203, 0
    %v1381 = vsel %vm920, %v1204, 0
    %v1384 = vsel %vm920, %v1205, 0
    %v1387 = vsel %vm920, %v1206, 0
    %v1390 = vsel %vm920, %v1207, 0
    %v1393 = vsel %vm920, %v1208, 0
    %v1396 = vsel %vm920, %v1209, 0
    %v1399 = vsel %vm920, %v1210, 0
    %v1402 = vsel %vm920, %v1211, 0
    %v1405 = vsel %vm920, %v1212, 0
    %v1408 = vsel %vm920, %v1213, 0
    %v1411 = vsel %vm920, %v1214, 0
    %1413 = vmatpush.bf16.msra.mxu0 0
    %1414 = vmatpush.bf16.msra.mxu0 0
    %1415 = vmatpush.bf16.msra.mxu0 0
    %1416 = vmatpush.bf16.msra.mxu0 0
    %1417 = vmatpush.bf16.msra.mxu0 0
    %1418 = vmatpush.bf16.msra.mxu0 0
    %1419 = vmatpush.bf16.msra.mxu0 %v1374
    %1420 = vmatpush.bf16.msra.mxu0 %v1373
    %1421 = vmatmul.bf16.gmra.mxu0 %v1378
    %v1422 = vpop.f32.mrf.mxu0
    %v1423 = vadd.f32 0.0, %v1422
    %v1424 = vpop.f32.mrf.mxu0
    %v1425 = vadd.f32 0.0, %v1424
    %1426 = vmatmul.bf16.gmra.mxu0 %v1381
    %v1427 = vpop.f32.mrf.mxu0
    %v1428 = vadd.f32 0.0, %v1427
    %v1429 = vpop.f32.mrf.mxu0
    %v1430 = vadd.f32 0.0, %v1429
    %1431 = vmatmul.bf16.gmra.mxu0 %v1384
    %v1432 = vpop.f32.mrf.mxu0
    %v1433 = vadd.f32 0.0, %v1432
    %v1434 = vpop.f32.mrf.mxu0
    %v1435 = vadd.f32 0.0, %v1434
    %1436 = vmatmul.bf16.gmra.mxu0 %v1387
    %v1437 = vpop.f32.mrf.mxu0
    %v1438 = vadd.f32 0.0, %v1437
    %v1439 = vpop.f32.mrf.mxu0
    %v1440 = vadd.f32 0.0, %v1439
    %1441 = vmatmul.bf16.gmra.mxu0 %v1390
    %v1442 = vpop.f32.mrf.mxu0
    %v1443 = vadd.f32 0.0, %v1442
    %v1444 = vpop.f32.mrf.mxu0
    %v1445 = vadd.f32 0.0, %v1444
    %1446 = vmatmul.bf16.gmra.mxu0 %v1393
    %v1447 = vpop.f32.mrf.mxu0
    %v1448 = vadd.f32 0.0, %v1447
    %v1449 = vpop.f32.mrf.mxu0
    %v1450 = vadd.f32 0.0, %v1449
    %1451 = vmatmul.bf16.gmra.mxu0 %v1396
    %v1452 = vpop.f32.mrf.mxu0
    %v1453 = vadd.f32 0.0, %v1452
    %v1454 = vpop.f32.mrf.mxu0
    %v1455 = vadd.f32 0.0, %v1454
    %1456 = vmatmul.bf16.gmra.mxu0 %v1399
    %v1457 = vpop.f32.mrf.mxu0
    %v1458 = vadd.f32 0.0, %v1457
    %v1459 = vpop.f32.mrf.mxu0
    %v1460 = vadd.f32 0.0, %v1459
    %1461 = vmatmul.bf16.gmra.mxu0 %v1402
    %v1462 = vpop.f32.mrf.mxu0
    %v1463 = vadd.f32 0.0, %v1462
    %v1464 = vpop.f32.mrf.mxu0
    %v1465 = vadd.f32 0.0, %v1464
    %1466 = vmatmul.bf16.gmra.mxu0 %v1405
    %v1467 = vpop.f32.mrf.mxu0
    %v1468 = vadd.f32 0.0, %v1467
    %v1469 = vpop.f32.mrf.mxu0
    %v1470 = vadd.f32 0.0, %v1469
    %1471 = vmatmul.bf16.gmra.mxu0 %v1408
    %v1472 = vpop.f32.mrf.mxu0
    %v1473 = vadd.f32 0.0, %v1472
    %v1474 = vpop.f32.mrf.mxu0
    %v1475 = vadd.f32 0.0, %v1474
    %1476 = vmatmul.bf16.gmra.mxu0 %v1411
    %v1477 = vpop.f32.mrf.mxu0
    %v1478 = vadd.f32 0.0, %v1477
    %v1479 = vpop.f32.mrf.mxu0
    %v1480 = vadd.f32 0.0, %v1479
    %1481 = vdwg.mxu0
    %v1486 = vunpack.c.l.b16 %v1194
    %v1487 = vunpack.c.l.b16 %v1195
    %v1488 = vunpack.c.l.b16 %v1196
    %v1489 = vunpack.c.l.b16 %v1197
    %v1490 = vpack.c.b16 %v1487, %v1486
    %v1491 = vpack.c.b16 %v1489, %v1488
    %v1495 = vsel %vm920, %v1353, 0
    %v1498 = vsel %vm920, %v1354, 0
    %v1501 = vsel %vm920, %v1355, 0
    %v1504 = vsel %vm920, %v1356, 0
    %v1507 = vsel %vm920, %v1357, 0
    %v1510 = vsel %vm920, %v1358, 0
    %v1513 = vsel %vm920, %v1359, 0
    %v1516 = vsel %vm920, %v1360, 0
    %v1519 = vsel %vm920, %v1361, 0
    %v1522 = vsel %vm920, %v1362, 0
    %v1525 = vsel %vm920, %v1363, 0
    %v1528 = vsel %vm920, %v1364, 0
    %1530 = vmatpush.bf16.msra.mxu0 0
    %1531 = vmatpush.bf16.msra.mxu0 0
    %1532 = vmatpush.bf16.msra.mxu0 0
    %1533 = vmatpush.bf16.msra.mxu0 0
    %1534 = vmatpush.bf16.msra.mxu0 0
    %1535 = vmatpush.bf16.msra.mxu0 0
    %1536 = vmatpush.bf16.msra.mxu0 %v1491
    %1537 = vmatpush.bf16.msra.mxu0 %v1490
    %1538 = vmatmul.bf16.gmra.mxu0 %v1495
    %v1539 = vpop.f32.mrf.mxu0
    %v1540 = vadd.f32 %v1423, %v1539
    %v1541 = vpop.f32.mrf.mxu0
    %v1542 = vadd.f32 %v1425, %v1541
    %1543 = vmatmul.bf16.gmra.mxu0 %v1498
    %v1544 = vpop.f32.mrf.mxu0
    %v1545 = vadd.f32 %v1428, %v1544
    %v1546 = vpop.f32.mrf.mxu0
    %v1547 = vadd.f32 %v1430, %v1546
    %1548 = vmatmul.bf16.gmra.mxu0 %v1501
    %v1549 = vpop.f32.mrf.mxu0
    %v1550 = vadd.f32 %v1433, %v1549
    %v1551 = vpop.f32.mrf.mxu0
    %v1552 = vadd.f32 %v1435, %v1551
    %1553 = vmatmul.bf16.gmra.mxu0 %v1504
    %v1554 = vpop.f32.mrf.mxu0
    %v1555 = vadd.f32 %v1438, %v1554
    %v1556 = vpop.f32.mrf.mxu0
    %v1557 = vadd.f32 %v1440, %v1556
    %1558 = vmatmul.bf16.gmra.mxu0 %v1507
    %v1559 = vpop.f32.mrf.mxu0
    %v1560 = vadd.f32 %v1443, %v1559
    %v1561 = vpop.f32.mrf.mxu0
    %v1562 = vadd.f32 %v1445, %v1561
    %1563 = vmatmul.bf16.gmra.mxu0 %v1510
    %v1564 = vpop.f32.mrf.mxu0
    %v1565 = vadd.f32 %v1448, %v1564
    %v1566 = vpop.f32.mrf.mxu0
    %v1567 = vadd.f32 %v1450, %v1566
    %1568 = vmatmul.bf16.gmra.mxu0 %v1513
    %v1569 = vpop.f32.mrf.mxu0
    %v1570 = vadd.f32 %v1453, %v1569
    %v1571 = vpop.f32.mrf.mxu0
    %v1572 = vadd.f32 %v1455, %v1571
    %1573 = vmatmul.bf16.gmra.mxu0 %v1516
    %v1574 = vpop.f32.mrf.mxu0
    %v1575 = vadd.f32 %v1458, %v1574
    %v1576 = vpop.f32.mrf.mxu0
    %v1577 = vadd.f32 %v1460, %v1576
    %1578 = vmatmul.bf16.gmra.mxu0 %v1519
    %v1579 = vpop.f32.mrf.mxu0
    %v1580 = vadd.f32 %v1463, %v1579
    %v1581 = vpop.f32.mrf.mxu0
    %v1582 = vadd.f32 %v1465, %v1581
    %1583 = vmatmul.bf16.gmra.mxu0 %v1522
    %v1584 = vpop.f32.mrf.mxu0
    %v1585 = vadd.f32 %v1468, %v1584
    %v1586 = vpop.f32.mrf.mxu0
    %v1587 = vadd.f32 %v1470, %v1586
    %1588 = vmatmul.bf16.gmra.mxu0 %v1525
    %v1589 = vpop.f32.mrf.mxu0
    %v1590 = vadd.f32 %v1473, %v1589
    %v1591 = vpop.f32.mrf.mxu0
    %v1592 = vadd.f32 %v1475, %v1591
    %1593 = vmatmul.bf16.gmra.mxu0 %v1528
    %v1594 = vpop.f32.mrf.mxu0
    %v1595 = vadd.f32 %v1478, %v1594
    %v1596 = vpop.f32.mrf.mxu0
    %v1597 = vadd.f32 %v1480, %v1596
    %1598 = vdwg.mxu0
    %v1600 = vperm.slane %v1202, 0
    %v1602 = vadd.f32 %v1540, %v1600
    %v1603 = vadd.f32 %v1542, %v1600
    %v1604 = vadd.f32 %v1545, %v1600
    %v1605 = vadd.f32 %v1547, %v1600
    %v1606 = vadd.f32 %v1550, %v1600
    %v1607 = vadd.f32 %v1552, %v1600
    %v1608 = vadd.f32 %v1555, %v1600
    %v1609 = vadd.f32 %v1557, %v1600
    %v1610 = vadd.f32 %v1560, %v1600
    %v1611 = vadd.f32 %v1562, %v1600
    %v1612 = vadd.f32 %v1565, %v1600
    %v1613 = vadd.f32 %v1567, %v1600
    %v1614 = vadd.f32 %v1570, %v1600
    %v1615 = vadd.f32 %v1572, %v1600
    %v1616 = vadd.f32 %v1575, %v1600
    %v1617 = vadd.f32 %v1577, %v1600
    %v1618 = vadd.f32 %v1580, %v1600
    %v1619 = vadd.f32 %v1582, %v1600
    %v1620 = vadd.f32 %v1585, %v1600
    %v1621 = vadd.f32 %v1587, %v1600
    %v1622 = vadd.f32 %v1590, %v1600
    %v1623 = vadd.f32 %v1592, %v1600
    %v1624 = vadd.f32 %v1595, %v1600
    %v1625 = vadd.f32 %v1597, %v1600
    %v1626 = vmax.f32 %v1602, 0.0
    %v1627 = vmax.f32 %v1603, 0.0
    %v1628 = vmax.f32 %v1604, 0.0
    %v1629 = vmax.f32 %v1605, 0.0
    %v1630 = vmax.f32 %v1606, 0.0
    %v1631 = vmax.f32 %v1607, 0.0
    %v1632 = vmax.f32 %v1608, 0.0
    %v1633 = vmax.f32 %v1609, 0.0
    %v1634 = vmax.f32 %v1610, 0.0
    %v1635 = vmax.f32 %v1611, 0.0
    %v1636 = vmax.f32 %v1612, 0.0
    %v1637 = vmax.f32 %v1613, 0.0
    %v1638 = vmax.f32 %v1614, 0.0
    %v1639 = vmax.f32 %v1615, 0.0
    %v1640 = vmax.f32 %v1616, 0.0
    %v1641 = vmax.f32 %v1617, 0.0
    %v1642 = vmax.f32 %v1618, 0.0
    %v1643 = vmax.f32 %v1619, 0.0
    %v1644 = vmax.f32 %v1620, 0.0
    %v1645 = vmax.f32 %v1621, 0.0
    %v1646 = vmax.f32 %v1622, 0.0
    %v1647 = vmax.f32 %v1623, 0.0
    %v1648 = vmax.f32 %v1624, 0.0
    %v1649 = vmax.f32 %v1625, 0.0
    %1650 = vst [vmem:[#allocation10] sm:$0xff] %v1626
    %1651 = vst [vmem:[#allocation10 + $0x8] sm:$0xff] %v1627
    %1652 = vst [vmem:[#allocation10 + $0x10] sm:$0xff] %v1628
    %1653 = vst [vmem:[#allocation10 + $0x18] sm:$0xff] %v1629
    %1654 = vst [vmem:[#allocation10 + $0x20] sm:$0xff] %v1630
    %1655 = vst [vmem:[#allocation10 + $0x28] sm:$0xff] %v1631
    %1656 = vst [vmem:[#allocation10 + $0x30] sm:$0xff] %v1632
    %1657 = vst [vmem:[#allocation10 + $0x38] sm:$0xff] %v1633
    %1658 = vst [vmem:[#allocation10 + $0x40] sm:$0xff] %v1634
    %1659 = vst [vmem:[#allocation10 + $0x48] sm:$0xff] %v1635
    %1660 = vst [vmem:[#allocation10 + $0x50] sm:$0xff] %v1636
    %1661 = vst [vmem:[#allocation10 + $0x58] sm:$0xff] %v1637
    %1662 = vst [vmem:[#allocation10 + $0x60] sm:$0xff] %v1638
    %1663 = vst [vmem:[#allocation10 + $0x68] sm:$0xff] %v1639
    %1664 = vst [vmem:[#allocation10 + $0x70] sm:$0xff] %v1640
    %1665 = vst [vmem:[#allocation10 + $0x78] sm:$0xff] %v1641
    %1666 = vst [vmem:[#allocation10 + $0x80] sm:$0xff] %v1642
    %1667 = vst [vmem:[#allocation10 + $0x88] sm:$0xff] %v1643
    %1668 = vst [vmem:[#allocation10 + $0x90] sm:$0xff] %v1644
    %1669 = vst [vmem:[#allocation10 + $0x98] sm:$0xff] %v1645
    %1670 = vst [vmem:[#allocation10 + $0xa0] sm:$0xff] %v1646
    %1671 = vst [vmem:[#allocation10 + $0xa8] sm:$0xff] %v1647
    %1672 = vst [vmem:[#allocation10 + $0xb0] sm:$0xff] %v1648
    %1673 = vst [vmem:[#allocation10 + $0xb8] sm:$0xff] %v1649
    // Predicated region
    $region62: #{tpu_custom_call.1} parent=1 // pred_check
      _
    $region63: #{tpu_custom_call.1} parent=1 // pred_check_branch
      %1675 = sbr.rel (0) target = $region65
    $region64: #{tpu_custom_call.1} parent=1 // pred_region
      %1677 = vsyncadd [#allocation4], 0
      %s1678 = sshll.u32 [#allocation10], 4
      %s1679 = int_to_ptr.vmem [resolvable:$true] %s1678
      %s1680 = sshll.u32 %s11, 4
      %s1681 = int_to_ptr.hbm [resolvable:$true] %s1680
      %1686 = dma.vmem_to_hbm [thread:$0]  %s1679, 3072, %s1681, [#allocation4], 128, 128, 8
    $region65: #{tpu_custom_call.1} parent=1 // pred_fallthru
      _
    // Predicated region
    $region66: #{tpu_custom_call.1} parent=1 // pred_check
      _
    $region67: #{tpu_custom_call.1} parent=1 // pred_check_branch
      %1688 = sbr.rel (0) target = $region69
    $region68: #{tpu_custom_call.1} parent=1 // pred_region
      %1690 = dma.done [#allocation4], 3072
    $region69: #{tpu_custom_call.1} parent=1 // pred_fallthru
      _
    %1691 = vsyncpa [#allocation3], 1
    %1692 = vsyncpa [#allocation6], 1
    %1693 = vsyncpa [#allocation9], 1
    %1694 = vsyncpa [#allocation4], 1

</llo_original>
